<compile_context>
chip_gen: v7x
topology: tpu7x:2x2x1
jax: 0.10.0
libtpu: 0.0.40
codegen_flags: <defaults>
</compile_context>

<pallas_src>
import jax
import jax.numpy as jnp
import numpy as np
from jax.experimental import pallas as pl
from jax.experimental.pallas import tpu as pltpu


def _round_up(x, m):
    return ((x + m - 1) // m) * m


def _pick_tile_n(n, tile_n):
    """Row-tile size: multiple of 8 (f32 sublane), capped at ~n/2 so the
    parallel grid axis has >= 2 steps (keeps both v7x TensorCores busy)."""
    tn = min(tile_n, _round_up(n, 8))
    if n > 8:
        tn = min(tn, _round_up((n + 1) // 2, 8))
    return max(tn, 8)


def _attn_net_kernel(x_ref, w1_ref, b1_ref, w2_ref, b2_ref, a_ref):
    # x_ref : (TN, L)      input patch-feature tile (pipelined)
    # w1_ref: (L, D)       bf16, resident across the whole grid
    # b1_ref: (1, D)       f32, resident
    # w2_ref: (D, O_pad)   bf16, resident, lane-padded output dim
    # b2_ref: (1, O_pad)   f32, resident
    # a_ref : (TN, O_pad)  lane-dense output tile
    x = x_ref[...].astype(jnp.bfloat16)          # no-op if x already bf16
    h = jnp.dot(x, w1_ref[...], preferred_element_type=jnp.float32)
    h = jnp.tanh(h + b1_ref[...])                # bias + tanh in f32
    a = jnp.dot(h.astype(jnp.bfloat16), w2_ref[...],
                preferred_element_type=jnp.float32)
    a_ref[...] = (a + b2_ref[...]).astype(a_ref.dtype)


def attn_net_forward(x, w1, b1, w2, b2, *, tile_n=2048):
    """x: (N, L); w1: (L, D); b1: (D,); w2: (D, n_classes); b2: (n_classes,).

    Returns (A, x) with A: (N, n_classes), matching Attn_Net.forward.
    Matmuls are bf16 on the MXU with f32 accumulation.
    """
    n, l = x.shape
    l_w, d = w1.shape
    d_w, n_classes = w2.shape
    assert l == l_w and d == d_w and b1.shape == (d,) and b2.shape == (n_classes,)

    # Lane-dense output: pad n_classes up to a full 128-lane vreg.
    o_pad = _round_up(n_classes, 128)
    tn = _pick_tile_n(n, tile_n)
    grid_n = pl.cdiv(n, tn)   # ragged last block handled by Pallas (masked)

    # Weights to bf16 once (resident in VMEM; no per-step cast). Biases stay f32.
    w1_bf = w1.astype(jnp.bfloat16)
    w2_bf = jnp.pad(w2, ((0, 0), (0, o_pad - n_classes))).astype(jnp.bfloat16)
    b1_f = b1.reshape(1, d).astype(jnp.float32)
    b2_f = jnp.pad(b2, ((0, o_pad - n_classes),)).reshape(1, o_pad).astype(jnp.float32)

    a_pad = pl.pallas_call(
        _attn_net_kernel,
        out_shape=jax.ShapeDtypeStruct((n, o_pad), x.dtype),
        grid_spec=pltpu.PrefetchScalarGridSpec(
            num_scalar_prefetch=0,
            grid=(grid_n,),
            in_specs=[
                pl.BlockSpec((tn, l), lambda i: (i, 0)),      # x tile (pipelined)
                pl.BlockSpec((l, d), lambda i: (0, 0)),       # W1 (resident, bf16)
                pl.BlockSpec((1, d), lambda i: (0, 0)),       # b1 (resident, f32)
                pl.BlockSpec((d, o_pad), lambda i: (0, 0)),   # W2 (resident, bf16)
                pl.BlockSpec((1, o_pad), lambda i: (0, 0)),   # b2 (resident, f32)
            ],
            out_specs=pl.BlockSpec((tn, o_pad), lambda i: (i, 0)),
        ),
        compiler_params=pltpu.CompilerParams(
            dimension_semantics=("parallel",),
            vmem_limit_bytes=48 * 1024 * 1024,
        ),
    )(x, w1_bf, b1_f, w2_bf, b2_f)

    A = a_pad[:, :n_classes]
    return A, x


def init_linear(key, in_features, out_features, dtype=jnp.float32):
    """nn.Linear default init, stored as (in_features, out_features)."""
    kw, kb = jax.random.split(key)
    bound = 1.0 / np.sqrt(in_features)
    w = jax.random.uniform(kw, (in_features, out_features),
                           minval=-bound, maxval=bound, dtype=dtype)
    b = jax.random.uniform(kb, (out_features,),
                           minval=-bound, maxval=bound, dtype=dtype)
    return w, b


if __name__ == "__main__":
    key = jax.random.PRNGKey(0)
    kx, k1, k2 = jax.random.split(key, 3)

    # Small shapes consistent with Attn_Net defaults; N=100 exercises the
    # ragged last block (grid of 2 tiles of 56 rows, second one masked).
    N = 100         # patches in the bag
    L = 1024        # in_features (module default)
    D = 256         # hidden (module default)
    N_CLASSES = 1   # module default

    x = jax.random.normal(kx, (N, L), dtype=jnp.float32)
    w1, b1 = init_linear(k1, L, D)
    w2, b2 = init_linear(k2, D, N_CLASSES)

    A, x_out = attn_net_forward(x, w1, b1, w2, b2)
    A = jax.block_until_ready(A)

    # Pure-JAX f32 reference of the forward pass.
    ref = jnp.tanh(x @ w1 + b1[None, :]) @ w2 + b2[None, :]
    assert A.shape == (N, N_CLASSES)
    assert x_out.shape == x.shape
    # bf16 matmul (f32 accumulation) vs f32 reference -> loose tolerance.
    np.testing.assert_allclose(np.asarray(A), np.asarray(ref),
                               rtol=2e-2, atol=2e-2)
    np.testing.assert_allclose(np.asarray(x_out), np.asarray(x))

    print("KERNEL_OK")
</pallas_src>

<mosaic_0001>
module attributes {stable_mosaic.version = 11 : i64} {
  func.func @_attn_net_kernel(%arg0: i32, %arg1: memref<56x1024xf32, #tpu.memory_space<vmem>>, %arg2: memref<1024x256xbf16, #tpu.memory_space<vmem>>, %arg3: memref<1x256xf32, #tpu.memory_space<vmem>>, %arg4: memref<256x128xbf16, #tpu.memory_space<vmem>>, %arg5: memref<1x128xf32, #tpu.memory_space<vmem>>, %arg6: memref<56x128xf32, #tpu.memory_space<vmem>>) attributes {dimension_semantics = [#tpu.dimension_semantics<parallel>], iteration_bounds = array<i64: 2>, scalar_prefetch = 0 : i64, scratch_operands = 0 : i64, tpu.core_type = #tpu.core_type<tc>, window_params = [{transform_indices = @transform_0, window_bounds = array<i64: 56, 1024>}, {pipeline_mode = #tpu.pipeline_mode<synchronous>, transform_indices = @transform_1, window_bounds = array<i64: 1024, 256>}, {pipeline_mode = #tpu.pipeline_mode<synchronous>, transform_indices = @transform_2, window_bounds = array<i64: 1, 256>}, {pipeline_mode = #tpu.pipeline_mode<synchronous>, transform_indices = @transform_3, window_bounds = array<i64: 256, 128>}, {pipeline_mode = #tpu.pipeline_mode<synchronous>, transform_indices = @transform_4, window_bounds = array<i64: 1, 128>}, {transform_indices = @transform_5, window_bounds = array<i64: 56, 128>}]} {
    %c0 = arith.constant 0 : index
    %c0_0 = arith.constant 0 : index
    %0 = vector.load %arg1[%c0, %c0_0] : memref<56x1024xf32, #tpu.memory_space<vmem>>, vector<56x1024xf32>
    %1 = arith.truncf %0 : vector<56x1024xf32> to vector<56x1024xbf16>
    %c0_1 = arith.constant 0 : index
    %c0_2 = arith.constant 0 : index
    %2 = vector.load %arg2[%c0_1, %c0_2] : memref<1024x256xbf16, #tpu.memory_space<vmem>>, vector<1024x256xbf16>
    %cst = arith.constant dense<0.000000e+00> : vector<56x256xf32>
    %3 = tpu.matmul %1, %2, %cst {dimension_numbers = #tpu.dot_dimension_numbers<[1], [0], [0], [1], [0, 0, 1, 1], [], []>} : vector<56x1024xbf16>, vector<1024x256xbf16>, vector<56x256xf32> -> vector<56x256xf32>
    %c0_3 = arith.constant 0 : index
    %c0_4 = arith.constant 0 : index
    %4 = vector.load %arg3[%c0_3, %c0_4] : memref<1x256xf32, #tpu.memory_space<vmem>>, vector<1x256xf32>
    %5 = vector.broadcast %4 : vector<1x256xf32> to vector<56x256xf32>
    %6 = arith.addf %3, %5 : vector<56x256xf32>
    %7 = math.tanh %6 : vector<56x256xf32>
    %8 = arith.truncf %7 : vector<56x256xf32> to vector<56x256xbf16>
    %c0_5 = arith.constant 0 : index
    %c0_6 = arith.constant 0 : index
    %9 = vector.load %arg4[%c0_5, %c0_6] : memref<256x128xbf16, #tpu.memory_space<vmem>>, vector<256x128xbf16>
    %cst_7 = arith.constant dense<0.000000e+00> : vector<56x128xf32>
    %10 = tpu.matmul %8, %9, %cst_7 {dimension_numbers = #tpu.dot_dimension_numbers<[1], [0], [0], [1], [0, 0, 1, 1], [], []>} : vector<56x256xbf16>, vector<256x128xbf16>, vector<56x128xf32> -> vector<56x128xf32>
    %c0_8 = arith.constant 0 : index
    %c0_9 = arith.constant 0 : index
    %11 = vector.load %arg5[%c0_8, %c0_9] : memref<1x128xf32, #tpu.memory_space<vmem>>, vector<1x128xf32>
    %12 = vector.broadcast %11 : vector<1x128xf32> to vector<56x128xf32>
    %13 = arith.addf %10, %12 : vector<56x128xf32>
    %c0_10 = arith.constant 0 : index
    %c0_11 = arith.constant 0 : index
    %14 = vector.load %arg6[%c0_10, %c0_11] : memref<56x128xf32, #tpu.memory_space<vmem>>, vector<56x128xf32>
    tpu.vector_store %arg6[%c0_10, %c0_11], %13 {strides = array<i32>} : memref<56x128xf32, #tpu.memory_space<vmem>>, vector<56x128xf32>,
    return
  }
  func.func @transform_0(%arg0: i32) -> (i32, i32) {
    %c0_i32 = arith.constant 0 : i32
    %c0_i32_0 = arith.constant 0 : i32
    return %arg0, %c0_i32 : i32, i32
  }
  func.func @transform_1(%arg0: i32) -> (i32, i32) {
    %c0_i32 = arith.constant 0 : i32
    %c0_i32_0 = arith.constant 0 : i32
    %c0_i32_1 = arith.constant 0 : i32
    return %c0_i32, %c0_i32_0 : i32, i32
  }
  func.func @transform_2(%arg0: i32) -> (i32, i32) {
    %c0_i32 = arith.constant 0 : i32
    %c0_i32_0 = arith.constant 0 : i32
    %c0_i32_1 = arith.constant 0 : i32
    return %c0_i32, %c0_i32_0 : i32, i32
  }
  func.func @transform_3(%arg0: i32) -> (i32, i32) {
    %c0_i32 = arith.constant 0 : i32
    %c0_i32_0 = arith.constant 0 : i32
    %c0_i32_1 = arith.constant 0 : i32
    return %c0_i32, %c0_i32_0 : i32, i32
  }
  func.func @transform_4(%arg0: i32) -> (i32, i32) {
    %c0_i32 = arith.constant 0 : i32
    %c0_i32_0 = arith.constant 0 : i32
    %c0_i32_1 = arith.constant 0 : i32
    return %c0_i32, %c0_i32_0 : i32, i32
  }
  func.func @transform_5(%arg0: i32) -> (i32, i32) {
    %c0_i32 = arith.constant 0 : i32
    %c0_i32_0 = arith.constant 0 : i32
    return %arg0, %c0_i32 : i32, i32
  }
}

</mosaic_0001>

<llo_original>
// kernel: tpu_custom_call.1
$region0: #{tpu_custom_call.1}
  #allocation0 [shape = 'u32[]', space=smem, size = 0x4, offset = 0x4, fixed_abs, tag = 'smem constant byte address 0x4 - core index']
  #allocation1 [shape = 'u32[144,128]{1,0:T(1,128)}', space=vmem, size = 0x12000, scoped, tag = 'internal scratch']
  %s0 = inlined_call_operand.hbm [shape: f32[100,1024], index: 0, kind: input, shape index: {}]
  %s1 = inlined_call_operand.hbm [shape: bf16[1024,256], index: 1, kind: input, shape index: {}]
  %s2 = inlined_call_operand.vmem [shape: f32[1,256], index: 2, kind: input, shape index: {}]
  %s3 = inlined_call_operand.hbm [shape: bf16[256,128], index: 3, kind: input, shape index: {}]
  %s4 = inlined_call_operand.vmem [shape: f32[1,128], index: 4, kind: input, shape index: {}]
  %s5 = inlined_call_operand.hbm [shape: f32[100,128], index: 5, kind: output, shape index: {}]
  %s6 = sld [smem:[#allocation0]]
  $region65: #{tpu_custom_call.1} parent=0
    _
  %s8 = ssub.s32 1, %s6
  %s9 = scalar_select 0, %s8, %s6
  $region1: #{tpu_custom_call.1} parent=0
    #allocation2 [shape = 'u8[458752]{0}', space=vmem, size = 0x70000, scoped, tag = 'input window, operand 0']
    #allocation3 [shape = 's32[2]{0}', space=sflag, size = 0x8, scoped, tag = 'scoped memory for tpu_custom_call.1']
    #allocation4 [shape = 's32[2]{0}', space=sflag, size = 0x8, scoped, tag = 'scoped memory for tpu_custom_call.1']
    #allocation5 [shape = 'u8[524288]{0}', space=vmem, size = 0x80000, scoped, tag = 'input window, operand 1, single buffered']
    #allocation6 [shape = 's32[1]{0}', space=sflag, size = 0x4, scoped, tag = 'scoped memory for tpu_custom_call.1']
    #allocation7 [shape = 'u8[65536]{0}', space=vmem, size = 0x10000, scoped, tag = 'input window, operand 3, single buffered']
    #allocation8 [shape = 'u8[57344]{0}', space=vmem, size = 0xe000, scoped, tag = 'output window, operand 0']
    %10 = vsyncpa [#allocation3], 0
    %s11 = scalar_lea.sflag [#allocation3], 1
    %12 = vsyncpa %s11, 0
    %13 = vsyncpa [#allocation6], 0
    %14 = vsyncpa [#allocation4], 0
    %s15 = scalar_lea.sflag [#allocation4], 1
    %16 = vsyncpa %s15, 0
    loop: start=0, step=1, limit=4
    $region2: #{tpu_custom_call.1} parent=1 // loop_pre_header
      _
    $region3: #{tpu_custom_call.1} parent=1 // loop_header
      %s18 = sphi 0, %s22
      %p19 = scmp.ge.s32.totalorder %s18, 4
      %s28 = sphi 0, %s30
      %s31 = sphi 0, %s28
      %s32 = sphi 0, %s31
      %s48 = sphi 0, %s32
      %s52 = sphi 0, %s52
      %s54 = sphi 0, %s52
      %s55 = sphi 0, %s54
      %s69 = sphi 0, %s55
      %s73 = sphi 0, %s73
      %s75 = sphi 0, %s73
      %s76 = sphi 0, %s75
      %s90 = sphi 0, %s76
      %s94 = sphi 0, %s94
      %s96 = sphi 0, %s94
      %s97 = sphi 0, %s96
      %s111 = sphi 0, %s97
      %s115 = sphi 0, %s115
      %s117 = sphi 0, %s115
      %s118 = sphi 0, %s117
      %s132 = sphi 0, %s118
      %s138 = sphi 0, %s140
      %s141 = sphi 0, %s138
      %s142 = sphi 0, %s141
      %s158 = sphi 0, %s142
    $region4: #{tpu_custom_call.1} parent=1 // loop_header_branch
      %21 = sbr.rel (%p19) target = $region8
    $region5: #{tpu_custom_call.1} parent=1 // loop_body
      %s23 = ssub.s32 %s18, 1
      %s24 = ssub.s32 %s18, 2
      %s25 = sadd.s32 %s18, 1
      %s26 = ssub.s32 %s18, %s25
      %p27 = scmp.eq.s32.totalorder %s26, 0
      %s29 = sadd.s32 %s28, 1
      %s30 = scalar_select %p27, %s28, %s29
      %p33 = pneg %p27
      %p34 = scmp.eq.s32.totalorder %s18, 1
      %p35 = por %p33, %p34
      %p36 = scmp.ne.s32.totalorder %s28, %s31
      %p37 = scmp.eq.s32.totalorder %s18, 0
      %p38 = por %p36, %p37
      %p39 = scmp.ne.s32.totalorder %s28, %s31
      %p40 = scmp.eq.s32.totalorder %s23, 1
      %p41 = por %p39, %p40
      %p42 = scmp.ne.s32.totalorder %s31, %s32
      %p43 = scmp.eq.s32.totalorder %s23, 0
      %p44 = por %p42, %p43
      %p45 = scmp.ne.s32.totalorder %s31, %s32
      %p46 = scmp.eq.s32.totalorder %s24, 1
      %p47 = por %p45, %p46
      %p49 = scmp.ne.s32.totalorder %s32, %s48
      %p50 = scmp.eq.s32.totalorder %s24, 0
      %p51 = por %p49, %p50
      %s53 = sadd.s32 %s52, 1
      %p56 = scmp.eq.s32.totalorder %s18, 1
      %p57 = scmp.ne.s32.totalorder %s52, %s54
      %p58 = scmp.eq.s32.totalorder %s18, 0
      %p59 = por %p57, %p58
      %p60 = scmp.ne.s32.totalorder %s52, %s54
      %p61 = scmp.eq.s32.totalorder %s23, 1
      %p62 = por %p60, %p61
      %p63 = scmp.ne.s32.totalorder %s54, %s55
      %p64 = scmp.eq.s32.totalorder %s23, 0
      %p65 = por %p63, %p64
      %p66 = scmp.ne.s32.totalorder %s54, %s55
      %p67 = scmp.eq.s32.totalorder %s24, 1
      %p68 = por %p66, %p67
      %p70 = scmp.ne.s32.totalorder %s55, %s69
      %p71 = scmp.eq.s32.totalorder %s24, 0
      %p72 = por %p70, %p71
      %s74 = sadd.s32 %s73, 1
      %p77 = scmp.eq.s32.totalorder %s18, 1
      %p78 = scmp.ne.s32.totalorder %s73, %s75
      %p79 = scmp.eq.s32.totalorder %s18, 0
      %p80 = por %p78, %p79
      %p81 = scmp.ne.s32.totalorder %s73, %s75
      %p82 = scmp.eq.s32.totalorder %s23, 1
      %p83 = por %p81, %p82
      %p84 = scmp.ne.s32.totalorder %s75, %s76
      %p85 = scmp.eq.s32.totalorder %s23, 0
      %p86 = por %p84, %p85
      %p87 = scmp.ne.s32.totalorder %s75, %s76
      %p88 = scmp.eq.s32.totalorder %s24, 1
      %p89 = por %p87, %p88
      %p91 = scmp.ne.s32.totalorder %s76, %s90
      %p92 = scmp.eq.s32.totalorder %s24, 0
      %p93 = por %p91, %p92
      %s95 = sadd.s32 %s94, 1
      %p98 = scmp.eq.s32.totalorder %s18, 1
      %p99 = scmp.ne.s32.totalorder %s94, %s96
      %p100 = scmp.eq.s32.totalorder %s18, 0
      %p101 = por %p99, %p100
      %p102 = scmp.ne.s32.totalorder %s94, %s96
      %p103 = scmp.eq.s32.totalorder %s23, 1
      %p104 = por %p102, %p103
      %p105 = scmp.ne.s32.totalorder %s96, %s97
      %p106 = scmp.eq.s32.totalorder %s23, 0
      %p107 = por %p105, %p106
      %p108 = scmp.ne.s32.totalorder %s96, %s97
      %p109 = scmp.eq.s32.totalorder %s24, 1
      %p110 = por %p108, %p109
      %p112 = scmp.ne.s32.totalorder %s97, %s111
      %p113 = scmp.eq.s32.totalorder %s24, 0
      %p114 = por %p112, %p113
      %s116 = sadd.s32 %s115, 1
      %p119 = scmp.eq.s32.totalorder %s18, 1
      %p120 = scmp.ne.s32.totalorder %s115, %s117
      %p121 = scmp.eq.s32.totalorder %s18, 0
      %p122 = por %p120, %p121
      %p123 = scmp.ne.s32.totalorder %s115, %s117
      %p124 = scmp.eq.s32.totalorder %s23, 1
      %p125 = por %p123, %p124
      %p126 = scmp.ne.s32.totalorder %s117, %s118
      %p127 = scmp.eq.s32.totalorder %s23, 0
      %p128 = por %p126, %p127
      %p129 = scmp.ne.s32.totalorder %s117, %s118
      %p130 = scmp.eq.s32.totalorder %s24, 1
      %p131 = por %p129, %p130
      %p133 = scmp.ne.s32.totalorder %s118, %s132
      %p134 = scmp.eq.s32.totalorder %s24, 0
      %p135 = por %p133, %p134
      %s136 = ssub.s32 %s18, %s25
      %p137 = scmp.eq.s32.totalorder %s136, 0
      %s139 = sadd.s32 %s138, 1
      %s140 = scalar_select %p137, %s138, %s139
      %p143 = pneg %p137
      %p144 = scmp.eq.s32.totalorder %s18, 1
      %p145 = por %p143, %p144
      %p146 = scmp.ne.s32.totalorder %s138, %s141
      %p147 = scmp.eq.s32.totalorder %s18, 0
      %p148 = por %p146, %p147
      %p149 = scmp.ne.s32.totalorder %s138, %s141
      %p150 = scmp.eq.s32.totalorder %s23, 1
      %p151 = por %p149, %p150
      %p152 = scmp.ne.s32.totalorder %s141, %s142
      %p153 = scmp.eq.s32.totalorder %s23, 0
      %p154 = por %p152, %p153
      %p155 = scmp.ne.s32.totalorder %s141, %s142
      %p156 = scmp.eq.s32.totalorder %s24, 1
      %p157 = por %p155, %p156
      %p159 = scmp.ne.s32.totalorder %s142, %s158
      %p160 = scmp.eq.s32.totalorder %s24, 0
      %p161 = por %p159, %p160
      %p162 = scmp.le.s32.totalorder 1, %s18
      %p163 = scmp.lt.s32.totalorder %s18, 3
      %p164 = pnand %p162, %p163
      %p165 = pneg %p164
      // Predicated region
      $region9: #{tpu_custom_call.1} parent=5 // pred_check
        _
      $region10: #{tpu_custom_call.1} parent=5 // pred_check_branch
        %167 = sbr.rel (%p164) target = $region12
      $region11: #{tpu_custom_call.1} parent=5 // pred_region
        %s168 = ssub.s32 %s18, 1
        // Predicated region
        $region13: #{tpu_custom_call.1} parent=11 // pred_check
          %p169 = pneg %p65
        $region14: #{tpu_custom_call.1} parent=11 // pred_check_branch
          %171 = sbr.rel (%p169) target = $region16
        $region15: #{tpu_custom_call.1} parent=11 // pred_region
          %s173 = ssub.s32 16384, 16384
          %174 = vsyncadd [#allocation6], %s173
          %s175 = sshll.u32 [#allocation5], 4
          %s176 = int_to_ptr.vmem [resolvable:$true] %s175
          %181 = dma.hbm_to_vmem [thread:$0]  %s1, 16384, %s176, [#allocation6], 128, 128, 8
        $region16: #{tpu_custom_call.1} parent=11 // pred_fallthru
          _
        // Predicated region
        $region17: #{tpu_custom_call.1} parent=11 // pred_check
          %p182 = pneg %p86
        $region18: #{tpu_custom_call.1} parent=11 // pred_check_branch
          %184 = sbr.rel (%p182) target = $region20
        $region19: #{tpu_custom_call.1} parent=11 // pred_region
          _
        $region20: #{tpu_custom_call.1} parent=11 // pred_fallthru
          _
        // Predicated region
        $region21: #{tpu_custom_call.1} parent=11 // pred_check
          %p185 = pneg %p107
        $region22: #{tpu_custom_call.1} parent=11 // pred_check_branch
          %187 = sbr.rel (%p185) target = $region24
        $region23: #{tpu_custom_call.1} parent=11 // pred_region
          %s189 = ssub.s32 2048, 2048
          %190 = vsyncadd [#allocation6], %s189
          %s191 = sshll.u32 [#allocation7], 4
          %s192 = int_to_ptr.vmem [resolvable:$true] %s191
          %197 = dma.hbm_to_vmem [thread:$0]  %s3, 2048, %s192, [#allocation6], 64, 64, 4
        $region24: #{tpu_custom_call.1} parent=11 // pred_fallthru
          _
        // Predicated region
        $region25: #{tpu_custom_call.1} parent=11 // pred_check
          %p198 = pneg %p128
        $region26: #{tpu_custom_call.1} parent=11 // pred_check_branch
          %200 = sbr.rel (%p198) target = $region28
        $region27: #{tpu_custom_call.1} parent=11 // pred_region
          _
        $region28: #{tpu_custom_call.1} parent=11 // pred_fallthru
          _
      $region12: #{tpu_custom_call.1} parent=5 // pred_fallthru
        _
      %p201 = scmp.lt.s32.totalorder %s18, 2
      // Predicated region
      $region29: #{tpu_custom_call.1} parent=5 // pred_check
        %p202 = pneg %p201
      $region30: #{tpu_custom_call.1} parent=5 // pred_check_branch
        %204 = sbr.rel (%p202) target = $region32
      $region31: #{tpu_custom_call.1} parent=5 // pred_region
        // Predicated region
        $region33: #{tpu_custom_call.1} parent=31 // pred_check
          %p205 = pneg %p38
        $region34: #{tpu_custom_call.1} parent=31 // pred_check_branch
          %207 = sbr.rel (%p205) target = $region36
        $region35: #{tpu_custom_call.1} parent=31 // pred_region
          %s208 = sand.u32 %s28, 1
          %s209 = scalar_lea.sflag [#allocation3], %s208
          %s210 = sand.u32 %s28, 1
          %s211 = smul.addr %s210, 448
          %s212 = scalar_lea.vmem [#allocation2], %s211
          %s213 = smul.u32 7, %s18
          %s214 = ssub.s32 13, %s213
          %p215 = scmp.lt.s32.totalorder %s214, 7
          %s216 = scalar_select %p215, %s214, 7
          %s217 = smul.u32 128, %s216
          %s218 = smul.u32 %s217, 8
          %s220 = ssub.s32 7168, %s218
          %221 = vsyncadd %s209, %s220
          %p222 = scmp.ne.s32.totalorder 0, %s218
          %s223 = smul.addr %s213, 8
          %s224 = smul.addr %s223, 128
          %s225 = scalar_lea.hbm %s0, %s224
          %s226 = smul.u32 64, %s216
          %s227 = sshll.u32 %s212, 4
          %s228 = int_to_ptr.vmem [resolvable:$true] %s227
          %s229 = sshll.u32 %s226, 4
          %233 = dma.hbm_to_vmem [thread:$0]  (%p222), %s225, %s229, %s228, %s209, 1024, 1024, 64
        $region36: #{tpu_custom_call.1} parent=31 // pred_fallthru
          _
      $region32: #{tpu_custom_call.1} parent=5 // pred_fallthru
        _
      %p234 = scmp.le.s32.totalorder 1, %s18
      %p235 = scmp.lt.s32.totalorder %s18, 3
      %p236 = pnand %p234, %p235
      %p237 = pneg %p236
      // Predicated region
      $region37: #{tpu_custom_call.1} parent=5 // pred_check
        _
      $region38: #{tpu_custom_call.1} parent=5 // pred_check_branch
        %239 = sbr.rel (%p236) target = $region40
      $region39: #{tpu_custom_call.1} parent=5 // pred_region
        %s240 = ssub.s32 %s18, 1
        %s241 = sand.u32 %s31, 1
        %s242 = scalar_lea.sflag [#allocation3], %s241
        %s243 = sand.u32 %s31, 1
        %s244 = smul.addr %s243, 448
        %s245 = scalar_lea.vmem [#allocation2], %s244
        // Predicated region
        $region41: #{tpu_custom_call.1} parent=39 // pred_check
          %p246 = pneg %p44
        $region42: #{tpu_custom_call.1} parent=39 // pred_check_branch
          %248 = sbr.rel (%p246) target = $region44
        $region43: #{tpu_custom_call.1} parent=39 // pred_region
          %249 = dma.done %s242, 7168
        $region44: #{tpu_custom_call.1} parent=39 // pred_fallthru
          _
        // Predicated region
        $region45: #{tpu_custom_call.1} parent=39 // pred_check
          %p250 = pneg %p65
        $region46: #{tpu_custom_call.1} parent=39 // pred_check_branch
          %252 = sbr.rel (%p250) target = $region48
        $region47: #{tpu_custom_call.1} parent=39 // pred_region
          %253 = dma.done [#allocation6], 16384
        $region48: #{tpu_custom_call.1} parent=39 // pred_fallthru
          _
        // Predicated region
        $region49: #{tpu_custom_call.1} parent=39 // pred_check
          %p254 = pneg %p107
        $region50: #{tpu_custom_call.1} parent=39 // pred_check_branch
          %256 = sbr.rel (%p254) target = $region52
        $region51: #{tpu_custom_call.1} parent=39 // pred_region
          %257 = dma.done [#allocation6], 2048
        $region52: #{tpu_custom_call.1} parent=39 // pred_fallthru
          _
        %s258 = sand.u32 %s31, 1
        %s259 = scalar_lea.sflag [#allocation3], %s258
        %s260 = sand.u32 %s31, 1
        %s261 = smul.addr %s260, 448
        %s262 = scalar_lea.vmem [#allocation2], %s261
        %p263 = pneg %p44
        %p264 = pneg %p41
        %p265 = pneg %p65
        %p266 = pneg %p62
        %p267 = pneg %p86
        %p268 = pneg %p83
        %p269 = pneg %p107
        %p270 = pneg %p104
        %p271 = pneg %p128
        %p272 = pneg %p125
        %p273 = pneg %p154
        %p274 = pneg %p151
        %s275 = sand.u32 %s141, 1
        %s276 = scalar_lea.sflag [#allocation4], %s275
        %s277 = sand.u32 %s141, 1
        %s278 = smul.addr %s277, 56
        %s279 = scalar_lea.vmem [#allocation8], %s278
        %s280 = smul.u32 7, %s23
        %s281 = ssub.s32 13, %s280
        %p282 = scmp.lt.s32.totalorder %s281, 7
        %s283 = scalar_select %p282, %s281, 7
        %s284 = smul.u32 128, %s283
        %s285 = smul.u32 %s284, 8
        %s286 = smul.u32 7, %s23
        %s287 = ssub.s32 13, %s286
        %p288 = scmp.lt.s32.totalorder %s287, 7
        %s289 = scalar_select %p288, %s287, 7
        %s290 = smul.u32 128, %s289
        %v292 = vld [vmem:[%s245] sm:$0xff]
        %v293 = vld [vmem:[%s245 + $0x8] sm:$0xff]
        %v294 = vld [vmem:[%s245 + $0x10] sm:$0xff]
        %v295 = vld [vmem:[%s245 + $0x18] sm:$0xff]
        %v296 = vld [vmem:[%s245 + $0x20] sm:$0xff]
        %v297 = vld [vmem:[%s245 + $0x28] sm:$0xff]
        %v298 = vld [vmem:[%s245 + $0x30] sm:$0xff]
        %v299 = vld [vmem:[%s245 + $0x38] sm:$0xff]
        %v300 = vld [vmem:[%s245 + $0x40] sm:$0xff]
        %v301 = vld [vmem:[%s245 + $0x48] sm:$0xff]
        %v302 = vld [vmem:[%s245 + $0x50] sm:$0xff]
        %v303 = vld [vmem:[%s245 + $0x58] sm:$0xff]
        %v304 = vld [vmem:[%s245 + $0x60] sm:$0xff]
        %v305 = vld [vmem:[%s245 + $0x68] sm:$0xff]
        %v306 = vld [vmem:[%s245 + $0x70] sm:$0xff]
        %v307 = vld [vmem:[%s245 + $0x78] sm:$0xff]
        %v308 = vld [vmem:[%s245 + $0x80] sm:$0xff]
        %v309 = vld [vmem:[%s245 + $0x88] sm:$0xff]
        %v310 = vld [vmem:[%s245 + $0x90] sm:$0xff]
        %v311 = vld [vmem:[%s245 + $0x98] sm:$0xff]
        %v312 = vld [vmem:[%s245 + $0xa0] sm:$0xff]
        %v313 = vld [vmem:[%s245 + $0xa8] sm:$0xff]
        %v314 = vld [vmem:[%s245 + $0xb0] sm:$0xff]
        %v315 = vld [vmem:[%s245 + $0xb8] sm:$0xff]
        %v316 = vld [vmem:[%s245 + $0xc0] sm:$0xff]
        %v317 = vld [vmem:[%s245 + $0xc8] sm:$0xff]
        %v318 = vld [vmem:[%s245 + $0xd0] sm:$0xff]
        %v319 = vld [vmem:[%s245 + $0xd8] sm:$0xff]
        %v320 = vld [vmem:[%s245 + $0xe0] sm:$0xff]
        %v321 = vld [vmem:[%s245 + $0xe8] sm:$0xff]
        %v322 = vld [vmem:[%s245 + $0xf0] sm:$0xff]
        %v323 = vld [vmem:[%s245 + $0xf8] sm:$0xff]
        %v324 = vld [vmem:[%s245 + $0x100] sm:$0xff]
        %v325 = vld [vmem:[%s245 + $0x108] sm:$0xff]
        %v326 = vld [vmem:[%s245 + $0x110] sm:$0xff]
        %v327 = vld [vmem:[%s245 + $0x118] sm:$0xff]
        %v328 = vld [vmem:[%s245 + $0x120] sm:$0xff]
        %v329 = vld [vmem:[%s245 + $0x128] sm:$0xff]
        %v330 = vld [vmem:[%s245 + $0x130] sm:$0xff]
        %v331 = vld [vmem:[%s245 + $0x138] sm:$0xff]
        %v332 = vld [vmem:[%s245 + $0x140] sm:$0xff]
        %v333 = vld [vmem:[%s245 + $0x148] sm:$0xff]
        %v334 = vld [vmem:[%s245 + $0x150] sm:$0xff]
        %v335 = vld [vmem:[%s245 + $0x158] sm:$0xff]
        %v336 = vld [vmem:[%s245 + $0x160] sm:$0xff]
        %v337 = vld [vmem:[%s245 + $0x168] sm:$0xff]
        %v338 = vld [vmem:[%s245 + $0x170] sm:$0xff]
        %v339 = vld [vmem:[%s245 + $0x178] sm:$0xff]
        %v340 = vld [vmem:[%s245 + $0x180] sm:$0xff]
        %v341 = vld [vmem:[%s245 + $0x188] sm:$0xff]
        %v342 = vld [vmem:[%s245 + $0x190] sm:$0xff]
        %v343 = vld [vmem:[%s245 + $0x198] sm:$0xff]
        %v344 = vld [vmem:[%s245 + $0x1a0] sm:$0xff]
        %v345 = vld [vmem:[%s245 + $0x1a8] sm:$0xff]
        %v346 = vld [vmem:[%s245 + $0x1b0] sm:$0xff]
        %v347 = vld [vmem:[%s245 + $0x1b8] sm:$0xff]
        %v348 = vpack.c.bf16 %v300, %v292
        %v349 = vpack.c.bf16 %v301, %v293
        %v350 = vpack.c.bf16 %v302, %v294
        %v351 = vpack.c.bf16 %v303, %v295
        %v352 = vpack.c.bf16 %v304, %v296
        %v353 = vpack.c.bf16 %v305, %v297
        %v354 = vpack.c.bf16 %v306, %v298
        %v355 = vpack.c.bf16 %v307, %v299
        %v356 = vpack.c.bf16 %v316, %v308
        %v357 = vpack.c.bf16 %v317, %v309
        %v358 = vpack.c.bf16 %v318, %v310
        %v359 = vpack.c.bf16 %v319, %v311
        %v360 = vpack.c.bf16 %v320, %v312
        %v361 = vpack.c.bf16 %v321, %v313
        %v362 = vpack.c.bf16 %v322, %v314
        %v363 = vpack.c.bf16 %v323, %v315
        %v364 = vpack.c.bf16 %v332, %v324
        %v365 = vpack.c.bf16 %v333, %v325
        %v366 = vpack.c.bf16 %v334, %v326
        %v367 = vpack.c.bf16 %v335, %v327
        %v368 = vpack.c.bf16 %v336, %v328
        %v369 = vpack.c.bf16 %v337, %v329
        %v370 = vpack.c.bf16 %v338, %v330
        %v371 = vpack.c.bf16 %v339, %v331
        %v372 = vpack.c.bf16 %v340, %v340
        %v373 = vpack.c.bf16 %v341, %v341
        %v374 = vpack.c.bf16 %v342, %v342
        %v375 = vpack.c.bf16 %v343, %v343
        %v376 = vpack.c.bf16 %v344, %v344
        %v377 = vpack.c.bf16 %v345, %v345
        %v378 = vpack.c.bf16 %v346, %v346
        %v379 = vpack.c.bf16 %v347, %v347
        %v380 = vld [vmem:[#allocation5] sm:$0xff]
        %v381 = vld [vmem:[#allocation5 + $0x8] sm:$0xff]
        %v382 = vld [vmem:[#allocation5 + $0x10] sm:$0xff]
        %v383 = vld [vmem:[#allocation5 + $0x18] sm:$0xff]
        %v384 = vld [vmem:[#allocation5 + $0x20] sm:$0xff]
        %v385 = vld [vmem:[#allocation5 + $0x28] sm:$0xff]
        %v386 = vld [vmem:[#allocation5 + $0x30] sm:$0xff]
        %v387 = vld [vmem:[#allocation5 + $0x38] sm:$0xff]
        %v388 = vld [vmem:[#allocation5 + $0x40] sm:$0xff]
        %v389 = vld [vmem:[#allocation5 + $0x48] sm:$0xff]
        %v390 = vld [vmem:[#allocation5 + $0x50] sm:$0xff]
        %v391 = vld [vmem:[#allocation5 + $0x58] sm:$0xff]
        %v392 = vld [vmem:[#allocation5 + $0x60] sm:$0xff]
        %v393 = vld [vmem:[#allocation5 + $0x68] sm:$0xff]
        %v394 = vld [vmem:[#allocation5 + $0x70] sm:$0xff]
        %v395 = vld [vmem:[#allocation5 + $0x78] sm:$0xff]
        %v396 = vld [vmem:[#allocation5 + $0x80] sm:$0xff]
        %v397 = vld [vmem:[#allocation5 + $0x88] sm:$0xff]
        %v398 = vld [vmem:[#allocation5 + $0x90] sm:$0xff]
        %v399 = vld [vmem:[#allocation5 + $0x98] sm:$0xff]
        %v400 = vld [vmem:[#allocation5 + $0xa0] sm:$0xff]
        %v401 = vld [vmem:[#allocation5 + $0xa8] sm:$0xff]
        %v402 = vld [vmem:[#allocation5 + $0xb0] sm:$0xff]
        %v403 = vld [vmem:[#allocation5 + $0xb8] sm:$0xff]
        %v404 = vld [vmem:[#allocation5 + $0xc0] sm:$0xff]
        %v405 = vld [vmem:[#allocation5 + $0xc8] sm:$0xff]
        %v406 = vld [vmem:[#allocation5 + $0xd0] sm:$0xff]
        %v407 = vld [vmem:[#allocation5 + $0xd8] sm:$0xff]
        %v408 = vld [vmem:[#allocation5 + $0xe0] sm:$0xff]
        %v409 = vld [vmem:[#allocation5 + $0xe8] sm:$0xff]
        %v410 = vld [vmem:[#allocation5 + $0xf0] sm:$0xff]
        %v411 = vld [vmem:[#allocation5 + $0xf8] sm:$0xff]
        %v412 = vld [vmem:[#allocation5 + $0x100] sm:$0xff]
        %v413 = vld [vmem:[#allocation5 + $0x108] sm:$0xff]
        %v414 = vld [vmem:[#allocation5 + $0x110] sm:$0xff]
        %v415 = vld [vmem:[#allocation5 + $0x118] sm:$0xff]
        %v416 = vld [vmem:[#allocation5 + $0x120] sm:$0xff]
        %v417 = vld [vmem:[#allocation5 + $0x128] sm:$0xff]
        %v418 = vld [vmem:[#allocation5 + $0x130] sm:$0xff]
        %v419 = vld [vmem:[#allocation5 + $0x138] sm:$0xff]
        %v420 = vld [vmem:[#allocation5 + $0x140] sm:$0xff]
        %v421 = vld [vmem:[#allocation5 + $0x148] sm:$0xff]
        %v422 = vld [vmem:[#allocation5 + $0x150] sm:$0xff]
        %v423 = vld [vmem:[#allocation5 + $0x158] sm:$0xff]
        %v424 = vld [vmem:[#allocation5 + $0x160] sm:$0xff]
        %v425 = vld [vmem:[#allocation5 + $0x168] sm:$0xff]
        %v426 = vld [vmem:[#allocation5 + $0x170] sm:$0xff]
        %v427 = vld [vmem:[#allocation5 + $0x178] sm:$0xff]
        %v428 = vld [vmem:[#allocation5 + $0x180] sm:$0xff]
        %v429 = vld [vmem:[#allocation5 + $0x188] sm:$0xff]
        %v430 = vld [vmem:[#allocation5 + $0x190] sm:$0xff]
        %v431 = vld [vmem:[#allocation5 + $0x198] sm:$0xff]
        %v432 = vld [vmem:[#allocation5 + $0x1a0] sm:$0xff]
        %v433 = vld [vmem:[#allocation5 + $0x1a8] sm:$0xff]
        %v434 = vld [vmem:[#allocation5 + $0x1b0] sm:$0xff]
        %v435 = vld [vmem:[#allocation5 + $0x1b8] sm:$0xff]
        %v436 = vld [vmem:[#allocation5 + $0x1c0] sm:$0xff]
        %v437 = vld [vmem:[#allocation5 + $0x1c8] sm:$0xff]
        %v438 = vld [vmem:[#allocation5 + $0x1d0] sm:$0xff]
        %v439 = vld [vmem:[#allocation5 + $0x1d8] sm:$0xff]
        %v440 = vld [vmem:[#allocation5 + $0x1e0] sm:$0xff]
        %v441 = vld [vmem:[#allocation5 + $0x1e8] sm:$0xff]
        %v442 = vld [vmem:[#allocation5 + $0x1f0] sm:$0xff]
        %v443 = vld [vmem:[#allocation5 + $0x1f8] sm:$0xff]
        %v444 = vld [vmem:[#allocation5 + $0x200] sm:$0xff]
        %v445 = vld [vmem:[#allocation5 + $0x208] sm:$0xff]
        %v446 = vld [vmem:[#allocation5 + $0x210] sm:$0xff]
        %v447 = vld [vmem:[#allocation5 + $0x218] sm:$0xff]
        %v448 = vld [vmem:[#allocation5 + $0x220] sm:$0xff]
        %v449 = vld [vmem:[#allocation5 + $0x228] sm:$0xff]
        %v450 = vld [vmem:[#allocation5 + $0x230] sm:$0xff]
        %v451 = vld [vmem:[#allocation5 + $0x238] sm:$0xff]
        %v452 = vld [vmem:[#allocation5 + $0x240] sm:$0xff]
        %v453 = vld [vmem:[#allocation5 + $0x248] sm:$0xff]
        %v454 = vld [vmem:[#allocation5 + $0x250] sm:$0xff]
        %v455 = vld [vmem:[#allocation5 + $0x258] sm:$0xff]
        %v456 = vld [vmem:[#allocation5 + $0x260] sm:$0xff]
        %v457 = vld [vmem:[#allocation5 + $0x268] sm:$0xff]
        %v458 = vld [vmem:[#allocation5 + $0x270] sm:$0xff]
        %v459 = vld [vmem:[#allocation5 + $0x278] sm:$0xff]
        %v460 = vld [vmem:[#allocation5 + $0x280] sm:$0xff]
        %v461 = vld [vmem:[#allocation5 + $0x288] sm:$0xff]
        %v462 = vld [vmem:[#allocation5 + $0x290] sm:$0xff]
        %v463 = vld [vmem:[#allocation5 + $0x298] sm:$0xff]
        %v464 = vld [vmem:[#allocation5 + $0x2a0] sm:$0xff]
        %v465 = vld [vmem:[#allocation5 + $0x2a8] sm:$0xff]
        %v466 = vld [vmem:[#allocation5 + $0x2b0] sm:$0xff]
        %v467 = vld [vmem:[#allocation5 + $0x2b8] sm:$0xff]
        %v468 = vld [vmem:[#allocation5 + $0x2c0] sm:$0xff]
        %v469 = vld [vmem:[#allocation5 + $0x2c8] sm:$0xff]
        %v470 = vld [vmem:[#allocation5 + $0x2d0] sm:$0xff]
        %v471 = vld [vmem:[#allocation5 + $0x2d8] sm:$0xff]
        %v472 = vld [vmem:[#allocation5 + $0x2e0] sm:$0xff]
        %v473 = vld [vmem:[#allocation5 + $0x2e8] sm:$0xff]
        %v474 = vld [vmem:[#allocation5 + $0x2f0] sm:$0xff]
        %v475 = vld [vmem:[#allocation5 + $0x2f8] sm:$0xff]
        %v476 = vld [vmem:[#allocation5 + $0x300] sm:$0xff]
        %v477 = vld [vmem:[#allocation5 + $0x308] sm:$0xff]
        %v478 = vld [vmem:[#allocation5 + $0x310] sm:$0xff]
        %v479 = vld [vmem:[#allocation5 + $0x318] sm:$0xff]
        %v480 = vld [vmem:[#allocation5 + $0x320] sm:$0xff]
        %v481 = vld [vmem:[#allocation5 + $0x328] sm:$0xff]
        %v482 = vld [vmem:[#allocation5 + $0x330] sm:$0xff]
        %v483 = vld [vmem:[#allocation5 + $0x338] sm:$0xff]
        %v484 = vld [vmem:[#allocation5 + $0x340] sm:$0xff]
        %v485 = vld [vmem:[#allocation5 + $0x348] sm:$0xff]
        %v486 = vld [vmem:[#allocation5 + $0x350] sm:$0xff]
        %v487 = vld [vmem:[#allocation5 + $0x358] sm:$0xff]
        %v488 = vld [vmem:[#allocation5 + $0x360] sm:$0xff]
        %v489 = vld [vmem:[#allocation5 + $0x368] sm:$0xff]
        %v490 = vld [vmem:[#allocation5 + $0x370] sm:$0xff]
        %v491 = vld [vmem:[#allocation5 + $0x378] sm:$0xff]
        %v492 = vld [vmem:[#allocation5 + $0x380] sm:$0xff]
        %v493 = vld [vmem:[#allocation5 + $0x388] sm:$0xff]
        %v494 = vld [vmem:[#allocation5 + $0x390] sm:$0xff]
        %v495 = vld [vmem:[#allocation5 + $0x398] sm:$0xff]
        %v496 = vld [vmem:[#allocation5 + $0x3a0] sm:$0xff]
        %v497 = vld [vmem:[#allocation5 + $0x3a8] sm:$0xff]
        %v498 = vld [vmem:[#allocation5 + $0x3b0] sm:$0xff]
        %v499 = vld [vmem:[#allocation5 + $0x3b8] sm:$0xff]
        %v500 = vld [vmem:[#allocation5 + $0x3c0] sm:$0xff]
        %v501 = vld [vmem:[#allocation5 + $0x3c8] sm:$0xff]
        %v502 = vld [vmem:[#allocation5 + $0x3d0] sm:$0xff]
        %v503 = vld [vmem:[#allocation5 + $0x3d8] sm:$0xff]
        %v504 = vld [vmem:[#allocation5 + $0x3e0] sm:$0xff]
        %v505 = vld [vmem:[#allocation5 + $0x3e8] sm:$0xff]
        %v506 = vld [vmem:[#allocation5 + $0x3f0] sm:$0xff]
        %v507 = vld [vmem:[#allocation5 + $0x3f8] sm:$0xff]
        %v508 = vld [vmem:[%s2] sm:$0x3]
        %v510 = vlaneseq
        %v511 = vshrl.u32 %v510, 7
        %v512 = vsub.s32 0, %v511
        %v513 = vrot.slane %v508, %v512
        %v514 = vlaneseq
        %v515 = vshrl.u32 %v514, 7
        %v516 = vsub.s32 1, %v515
        %v517 = vrot.slane %v508, %v516
        %v648 = vunpack.c.l.b16 %v380
        %v649 = vunpack.c.h.b16 %v380
        %v650 = vunpack.c.l.b16 %v381
        %v651 = vunpack.c.h.b16 %v381
        %v652 = vunpack.c.l.b16 %v382
        %v653 = vunpack.c.h.b16 %v382
        %v654 = vunpack.c.l.b16 %v383
        %v655 = vunpack.c.h.b16 %v383
        %v656 = vunpack.c.l.b16 %v384
        %v657 = vunpack.c.h.b16 %v384
        %v658 = vunpack.c.l.b16 %v385
        %v659 = vunpack.c.h.b16 %v385
        %v660 = vunpack.c.l.b16 %v386
        %v661 = vunpack.c.h.b16 %v386
        %v662 = vunpack.c.l.b16 %v387
        %v663 = vunpack.c.h.b16 %v387
        %v664 = vunpack.c.l.b16 %v388
        %v665 = vunpack.c.h.b16 %v388
        %v666 = vunpack.c.l.b16 %v389
        %v667 = vunpack.c.h.b16 %v389
        %v668 = vunpack.c.l.b16 %v390
        %v669 = vunpack.c.h.b16 %v390
        %v670 = vunpack.c.l.b16 %v391
        %v671 = vunpack.c.h.b16 %v391
        %v672 = vunpack.c.l.b16 %v392
        %v673 = vunpack.c.h.b16 %v392
        %v674 = vunpack.c.l.b16 %v393
        %v675 = vunpack.c.h.b16 %v393
        %v676 = vunpack.c.l.b16 %v394
        %v677 = vunpack.c.h.b16 %v394
        %v678 = vunpack.c.l.b16 %v395
        %v679 = vunpack.c.h.b16 %v395
        %v680 = vunpack.c.l.b16 %v396
        %v681 = vunpack.c.h.b16 %v396
        %v682 = vunpack.c.l.b16 %v397
        %v683 = vunpack.c.h.b16 %v397
        %v684 = vunpack.c.l.b16 %v398
        %v685 = vunpack.c.h.b16 %v398
        %v686 = vunpack.c.l.b16 %v399
        %v687 = vunpack.c.h.b16 %v399
        %v688 = vunpack.c.l.b16 %v400
        %v689 = vunpack.c.h.b16 %v400
        %v690 = vunpack.c.l.b16 %v401
        %v691 = vunpack.c.h.b16 %v401
        %v692 = vunpack.c.l.b16 %v402
        %v693 = vunpack.c.h.b16 %v402
        %v694 = vunpack.c.l.b16 %v403
        %v695 = vunpack.c.h.b16 %v403
        %v696 = vunpack.c.l.b16 %v404
        %v697 = vunpack.c.h.b16 %v404
        %v698 = vunpack.c.l.b16 %v405
        %v699 = vunpack.c.h.b16 %v405
        %v700 = vunpack.c.l.b16 %v406
        %v701 = vunpack.c.h.b16 %v406
        %v702 = vunpack.c.l.b16 %v407
        %v703 = vunpack.c.h.b16 %v407
        %v704 = vunpack.c.l.b16 %v408
        %v705 = vunpack.c.h.b16 %v408
        %v706 = vunpack.c.l.b16 %v409
        %v707 = vunpack.c.h.b16 %v409
        %v708 = vunpack.c.l.b16 %v410
        %v709 = vunpack.c.h.b16 %v410
        %v710 = vunpack.c.l.b16 %v411
        %v711 = vunpack.c.h.b16 %v411
        %v712 = vunpack.c.l.b16 %v412
        %v713 = vunpack.c.h.b16 %v412
        %v714 = vunpack.c.l.b16 %v413
        %v715 = vunpack.c.h.b16 %v413
        %v716 = vunpack.c.l.b16 %v414
        %v717 = vunpack.c.h.b16 %v414
        %v718 = vunpack.c.l.b16 %v415
        %v719 = vunpack.c.h.b16 %v415
        %v720 = vunpack.c.l.b16 %v416
        %v721 = vunpack.c.h.b16 %v416
        %v722 = vunpack.c.l.b16 %v417
        %v723 = vunpack.c.h.b16 %v417
        %v724 = vunpack.c.l.b16 %v418
        %v725 = vunpack.c.h.b16 %v418
        %v726 = vunpack.c.l.b16 %v419
        %v727 = vunpack.c.h.b16 %v419
        %v728 = vunpack.c.l.b16 %v420
        %v729 = vunpack.c.h.b16 %v420
        %v730 = vunpack.c.l.b16 %v421
        %v731 = vunpack.c.h.b16 %v421
        %v732 = vunpack.c.l.b16 %v422
        %v733 = vunpack.c.h.b16 %v422
        %v734 = vunpack.c.l.b16 %v423
        %v735 = vunpack.c.h.b16 %v423
        %v736 = vunpack.c.l.b16 %v424
        %v737 = vunpack.c.h.b16 %v424
        %v738 = vunpack.c.l.b16 %v425
        %v739 = vunpack.c.h.b16 %v425
        %v740 = vunpack.c.l.b16 %v426
        %v741 = vunpack.c.h.b16 %v426
        %v742 = vunpack.c.l.b16 %v427
        %v743 = vunpack.c.h.b16 %v427
        %v744 = vunpack.c.l.b16 %v428
        %v745 = vunpack.c.h.b16 %v428
        %v746 = vunpack.c.l.b16 %v429
        %v747 = vunpack.c.h.b16 %v429
        %v748 = vunpack.c.l.b16 %v430
        %v749 = vunpack.c.h.b16 %v430
        %v750 = vunpack.c.l.b16 %v431
        %v751 = vunpack.c.h.b16 %v431
        %v752 = vunpack.c.l.b16 %v432
        %v753 = vunpack.c.h.b16 %v432
        %v754 = vunpack.c.l.b16 %v433
        %v755 = vunpack.c.h.b16 %v433
        %v756 = vunpack.c.l.b16 %v434
        %v757 = vunpack.c.h.b16 %v434
        %v758 = vunpack.c.l.b16 %v435
        %v759 = vunpack.c.h.b16 %v435
        %v760 = vunpack.c.l.b16 %v436
        %v761 = vunpack.c.h.b16 %v436
        %v762 = vunpack.c.l.b16 %v437
        %v763 = vunpack.c.h.b16 %v437
        %v764 = vunpack.c.l.b16 %v438
        %v765 = vunpack.c.h.b16 %v438
        %v766 = vunpack.c.l.b16 %v439
        %v767 = vunpack.c.h.b16 %v439
        %v768 = vunpack.c.l.b16 %v440
        %v769 = vunpack.c.h.b16 %v440
        %v770 = vunpack.c.l.b16 %v441
        %v771 = vunpack.c.h.b16 %v441
        %v772 = vunpack.c.l.b16 %v442
        %v773 = vunpack.c.h.b16 %v442
        %v774 = vunpack.c.l.b16 %v443
        %v775 = vunpack.c.h.b16 %v443
        %v776 = vunpack.c.l.b16 %v444
        %v777 = vunpack.c.h.b16 %v444
        %v778 = vunpack.c.l.b16 %v445
        %v779 = vunpack.c.h.b16 %v445
        %v780 = vunpack.c.l.b16 %v446
        %v781 = vunpack.c.h.b16 %v446
        %v782 = vunpack.c.l.b16 %v447
        %v783 = vunpack.c.h.b16 %v447
        %v784 = vunpack.c.l.b16 %v448
        %v785 = vunpack.c.h.b16 %v448
        %v786 = vunpack.c.l.b16 %v449
        %v787 = vunpack.c.h.b16 %v449
        %v788 = vunpack.c.l.b16 %v450
        %v789 = vunpack.c.h.b16 %v450
        %v790 = vunpack.c.l.b16 %v451
        %v791 = vunpack.c.h.b16 %v451
        %v792 = vunpack.c.l.b16 %v452
        %v793 = vunpack.c.h.b16 %v452
        %v794 = vunpack.c.l.b16 %v453
        %v795 = vunpack.c.h.b16 %v453
        %v796 = vunpack.c.l.b16 %v454
        %v797 = vunpack.c.h.b16 %v454
        %v798 = vunpack.c.l.b16 %v455
        %v799 = vunpack.c.h.b16 %v455
        %v800 = vunpack.c.l.b16 %v456
        %v801 = vunpack.c.h.b16 %v456
        %v802 = vunpack.c.l.b16 %v457
        %v803 = vunpack.c.h.b16 %v457
        %v804 = vunpack.c.l.b16 %v458
        %v805 = vunpack.c.h.b16 %v458
        %v806 = vunpack.c.l.b16 %v459
        %v807 = vunpack.c.h.b16 %v459
        %v808 = vunpack.c.l.b16 %v460
        %v809 = vunpack.c.h.b16 %v460
        %v810 = vunpack.c.l.b16 %v461
        %v811 = vunpack.c.h.b16 %v461
        %v812 = vunpack.c.l.b16 %v462
        %v813 = vunpack.c.h.b16 %v462
        %v814 = vunpack.c.l.b16 %v463
        %v815 = vunpack.c.h.b16 %v463
        %v816 = vunpack.c.l.b16 %v464
        %v817 = vunpack.c.h.b16 %v464
        %v818 = vunpack.c.l.b16 %v465
        %v819 = vunpack.c.h.b16 %v465
        %v820 = vunpack.c.l.b16 %v466
        %v821 = vunpack.c.h.b16 %v466
        %v822 = vunpack.c.l.b16 %v467
        %v823 = vunpack.c.h.b16 %v467
        %v824 = vunpack.c.l.b16 %v468
        %v825 = vunpack.c.h.b16 %v468
        %v826 = vunpack.c.l.b16 %v469
        %v827 = vunpack.c.h.b16 %v469
        %v828 = vunpack.c.l.b16 %v470
        %v829 = vunpack.c.h.b16 %v470
        %v830 = vunpack.c.l.b16 %v471
        %v831 = vunpack.c.h.b16 %v471
        %v832 = vunpack.c.l.b16 %v472
        %v833 = vunpack.c.h.b16 %v472
        %v834 = vunpack.c.l.b16 %v473
        %v835 = vunpack.c.h.b16 %v473
        %v836 = vunpack.c.l.b16 %v474
        %v837 = vunpack.c.h.b16 %v474
        %v838 = vunpack.c.l.b16 %v475
        %v839 = vunpack.c.h.b16 %v475
        %v840 = vunpack.c.l.b16 %v476
        %v841 = vunpack.c.h.b16 %v476
        %v842 = vunpack.c.l.b16 %v477
        %v843 = vunpack.c.h.b16 %v477
        %v844 = vunpack.c.l.b16 %v478
        %v845 = vunpack.c.h.b16 %v478
        %v846 = vunpack.c.l.b16 %v479
        %v847 = vunpack.c.h.b16 %v479
        %v848 = vunpack.c.l.b16 %v480
        %v849 = vunpack.c.h.b16 %v480
        %v850 = vunpack.c.l.b16 %v481
        %v851 = vunpack.c.h.b16 %v481
        %v852 = vunpack.c.l.b16 %v482
        %v853 = vunpack.c.h.b16 %v482
        %v854 = vunpack.c.l.b16 %v483
        %v855 = vunpack.c.h.b16 %v483
        %v856 = vunpack.c.l.b16 %v484
        %v857 = vunpack.c.h.b16 %v484
        %v858 = vunpack.c.l.b16 %v485
        %v859 = vunpack.c.h.b16 %v485
        %v860 = vunpack.c.l.b16 %v486
        %v861 = vunpack.c.h.b16 %v486
        %v862 = vunpack.c.l.b16 %v487
        %v863 = vunpack.c.h.b16 %v487
        %v864 = vunpack.c.l.b16 %v488
        %v865 = vunpack.c.h.b16 %v488
        %v866 = vunpack.c.l.b16 %v489
        %v867 = vunpack.c.h.b16 %v489
        %v868 = vunpack.c.l.b16 %v490
        %v869 = vunpack.c.h.b16 %v490
        %v870 = vunpack.c.l.b16 %v491
        %v871 = vunpack.c.h.b16 %v491
        %v872 = vunpack.c.l.b16 %v492
        %v873 = vunpack.c.h.b16 %v492
        %v874 = vunpack.c.l.b16 %v493
        %v875 = vunpack.c.h.b16 %v493
        %v876 = vunpack.c.l.b16 %v494
        %v877 = vunpack.c.h.b16 %v494
        %v878 = vunpack.c.l.b16 %v495
        %v879 = vunpack.c.h.b16 %v495
        %v880 = vunpack.c.l.b16 %v496
        %v881 = vunpack.c.h.b16 %v496
        %v882 = vunpack.c.l.b16 %v497
        %v883 = vunpack.c.h.b16 %v497
        %v884 = vunpack.c.l.b16 %v498
        %v885 = vunpack.c.h.b16 %v498
        %v886 = vunpack.c.l.b16 %v499
        %v887 = vunpack.c.h.b16 %v499
        %v888 = vunpack.c.l.b16 %v500
        %v889 = vunpack.c.h.b16 %v500
        %v890 = vunpack.c.l.b16 %v501
        %v891 = vunpack.c.h.b16 %v501
        %v892 = vunpack.c.l.b16 %v502
        %v893 = vunpack.c.h.b16 %v502
        %v894 = vunpack.c.l.b16 %v503
        %v895 = vunpack.c.h.b16 %v503
        %v896 = vunpack.c.l.b16 %v504
        %v897 = vunpack.c.h.b16 %v504
        %v898 = vunpack.c.l.b16 %v505
        %v899 = vunpack.c.h.b16 %v505
        %v900 = vunpack.c.l.b16 %v506
        %v901 = vunpack.c.h.b16 %v506
        %v902 = vunpack.c.l.b16 %v507
        %v903 = vunpack.c.h.b16 %v507
        %v904 = vpack.c.b16 %v650, %v648
        %v905 = vpack.c.b16 %v651, %v649
        %v906 = vpack.c.b16 %v654, %v652
        %v907 = vpack.c.b16 %v655, %v653
        %v908 = vpack.c.b16 %v658, %v656
        %v909 = vpack.c.b16 %v659, %v657
        %v910 = vpack.c.b16 %v662, %v660
        %v911 = vpack.c.b16 %v663, %v661
        %v912 = vpack.c.b16 %v666, %v664
        %v913 = vpack.c.b16 %v667, %v665
        %v914 = vpack.c.b16 %v670, %v668
        %v915 = vpack.c.b16 %v671, %v669
        %v916 = vpack.c.b16 %v674, %v672
        %v917 = vpack.c.b16 %v675, %v673
        %v918 = vpack.c.b16 %v678, %v676
        %v919 = vpack.c.b16 %v679, %v677
        %v920 = vpack.c.b16 %v682, %v680
        %v921 = vpack.c.b16 %v683, %v681
        %v922 = vpack.c.b16 %v686, %v684
        %v923 = vpack.c.b16 %v687, %v685
        %v924 = vpack.c.b16 %v690, %v688
        %v925 = vpack.c.b16 %v691, %v689
        %v926 = vpack.c.b16 %v694, %v692
        %v927 = vpack.c.b16 %v695, %v693
        %v928 = vpack.c.b16 %v698, %v696
        %v929 = vpack.c.b16 %v699, %v697
        %v930 = vpack.c.b16 %v702, %v700
        %v931 = vpack.c.b16 %v703, %v701
        %v932 = vpack.c.b16 %v706, %v704
        %v933 = vpack.c.b16 %v707, %v705
        %v934 = vpack.c.b16 %v710, %v708
        %v935 = vpack.c.b16 %v711, %v709
        %v936 = vpack.c.b16 %v714, %v712
        %v937 = vpack.c.b16 %v715, %v713
        %v938 = vpack.c.b16 %v718, %v716
        %v939 = vpack.c.b16 %v719, %v717
        %v940 = vpack.c.b16 %v722, %v720
        %v941 = vpack.c.b16 %v723, %v721
        %v942 = vpack.c.b16 %v726, %v724
        %v943 = vpack.c.b16 %v727, %v725
        %v944 = vpack.c.b16 %v730, %v728
        %v945 = vpack.c.b16 %v731, %v729
        %v946 = vpack.c.b16 %v734, %v732
        %v947 = vpack.c.b16 %v735, %v733
        %v948 = vpack.c.b16 %v738, %v736
        %v949 = vpack.c.b16 %v739, %v737
        %v950 = vpack.c.b16 %v742, %v740
        %v951 = vpack.c.b16 %v743, %v741
        %v952 = vpack.c.b16 %v746, %v744
        %v953 = vpack.c.b16 %v747, %v745
        %v954 = vpack.c.b16 %v750, %v748
        %v955 = vpack.c.b16 %v751, %v749
        %v956 = vpack.c.b16 %v754, %v752
        %v957 = vpack.c.b16 %v755, %v753
        %v958 = vpack.c.b16 %v758, %v756
        %v959 = vpack.c.b16 %v759, %v757
        %v960 = vpack.c.b16 %v762, %v760
        %v961 = vpack.c.b16 %v763, %v761
        %v962 = vpack.c.b16 %v766, %v764
        %v963 = vpack.c.b16 %v767, %v765
        %v964 = vpack.c.b16 %v770, %v768
        %v965 = vpack.c.b16 %v771, %v769
        %v966 = vpack.c.b16 %v774, %v772
        %v967 = vpack.c.b16 %v775, %v773
        %v968 = vpack.c.b16 %v778, %v776
        %v969 = vpack.c.b16 %v779, %v777
        %v970 = vpack.c.b16 %v782, %v780
        %v971 = vpack.c.b16 %v783, %v781
        %v972 = vpack.c.b16 %v786, %v784
        %v973 = vpack.c.b16 %v787, %v785
        %v974 = vpack.c.b16 %v790, %v788
        %v975 = vpack.c.b16 %v791, %v789
        %v976 = vpack.c.b16 %v794, %v792
        %v977 = vpack.c.b16 %v795, %v793
        %v978 = vpack.c.b16 %v798, %v796
        %v979 = vpack.c.b16 %v799, %v797
        %v980 = vpack.c.b16 %v802, %v800
        %v981 = vpack.c.b16 %v803, %v801
        %v982 = vpack.c.b16 %v806, %v804
        %v983 = vpack.c.b16 %v807, %v805
        %v984 = vpack.c.b16 %v810, %v808
        %v985 = vpack.c.b16 %v811, %v809
        %v986 = vpack.c.b16 %v814, %v812
        %v987 = vpack.c.b16 %v815, %v813
        %v988 = vpack.c.b16 %v818, %v816
        %v989 = vpack.c.b16 %v819, %v817
        %v990 = vpack.c.b16 %v822, %v820
        %v991 = vpack.c.b16 %v823, %v821
        %v992 = vpack.c.b16 %v826, %v824
        %v993 = vpack.c.b16 %v827, %v825
        %v994 = vpack.c.b16 %v830, %v828
        %v995 = vpack.c.b16 %v831, %v829
        %v996 = vpack.c.b16 %v834, %v832
        %v997 = vpack.c.b16 %v835, %v833
        %v998 = vpack.c.b16 %v838, %v836
        %v999 = vpack.c.b16 %v839, %v837
        %v1000 = vpack.c.b16 %v842, %v840
        %v1001 = vpack.c.b16 %v843, %v841
        %v1002 = vpack.c.b16 %v846, %v844
        %v1003 = vpack.c.b16 %v847, %v845
        %v1004 = vpack.c.b16 %v850, %v848
        %v1005 = vpack.c.b16 %v851, %v849
        %v1006 = vpack.c.b16 %v854, %v852
        %v1007 = vpack.c.b16 %v855, %v853
        %v1008 = vpack.c.b16 %v858, %v856
        %v1009 = vpack.c.b16 %v859, %v857
        %v1010 = vpack.c.b16 %v862, %v860
        %v1011 = vpack.c.b16 %v863, %v861
        %v1012 = vpack.c.b16 %v866, %v864
        %v1013 = vpack.c.b16 %v867, %v865
        %v1014 = vpack.c.b16 %v870, %v868
        %v1015 = vpack.c.b16 %v871, %v869
        %v1016 = vpack.c.b16 %v874, %v872
        %v1017 = vpack.c.b16 %v875, %v873
        %v1018 = vpack.c.b16 %v878, %v876
        %v1019 = vpack.c.b16 %v879, %v877
        %v1020 = vpack.c.b16 %v882, %v880
        %v1021 = vpack.c.b16 %v883, %v881
        %v1022 = vpack.c.b16 %v886, %v884
        %v1023 = vpack.c.b16 %v887, %v885
        %v1024 = vpack.c.b16 %v890, %v888
        %v1025 = vpack.c.b16 %v891, %v889
        %v1026 = vpack.c.b16 %v894, %v892
        %v1027 = vpack.c.b16 %v895, %v893
        %v1028 = vpack.c.b16 %v898, %v896
        %v1029 = vpack.c.b16 %v899, %v897
        %v1030 = vpack.c.b16 %v902, %v900
        %v1031 = vpack.c.b16 %v903, %v901
        %1160 = vmatprep.subr.bf16.mxu0 %v905
        %1161 = vmatpush1.bf16.msra.mxu0 %v904
        %1162 = vmatprep.subr.bf16.mxu0 %v907
        %1163 = vmatpush1.bf16.msra.mxu0 %v906
        %1164 = vmatprep.subr.bf16.mxu0 %v909
        %1165 = vmatpush1.bf16.msra.mxu0 %v908
        %1166 = vmatprep.subr.bf16.mxu0 %v911
        %1167 = vmatpush1.bf16.msra.mxu0 %v910
        %1168 = vmatprep.subr.bf16.mxu0 %v913
        %1169 = vmatpush1.bf16.msra.mxu0 %v912
        %1170 = vmatprep.subr.bf16.mxu0 %v915
        %1171 = vmatpush1.bf16.msra.mxu0 %v914
        %1172 = vmatprep.subr.bf16.mxu0 %v917
        %1173 = vmatpush1.bf16.msra.mxu0 %v916
        %1174 = vmatprep.subr.bf16.mxu0 %v919
        %1175 = vmatpush1.bf16.msra.mxu0 %v918
        %1176 = vmatprep.subr.bf16.mxu0 %v921
        %1177 = vmatpush1.bf16.msra.mxu0 %v920
        %1178 = vmatprep.subr.bf16.mxu0 %v923
        %1179 = vmatpush1.bf16.msra.mxu0 %v922
        %1180 = vmatprep.subr.bf16.mxu0 %v925
        %1181 = vmatpush1.bf16.msra.mxu0 %v924
        %1182 = vmatprep.subr.bf16.mxu0 %v927
        %1183 = vmatpush1.bf16.msra.mxu0 %v926
        %1184 = vmatprep.subr.bf16.mxu0 %v929
        %1185 = vmatpush1.bf16.msra.mxu0 %v928
        %1186 = vmatprep.subr.bf16.mxu0 %v931
        %1187 = vmatpush1.bf16.msra.mxu0 %v930
        %1188 = vmatprep.subr.bf16.mxu0 %v933
        %1189 = vmatpush1.bf16.msra.mxu0 %v932
        %1190 = vmatprep.subr.bf16.mxu0 %v935
        %1191 = vmatpush1.bf16.msra.mxu0 %v934
        %1192 = vmatprep.mubr.bf16.mxu0 %v349
        %1193 = vmatmul.mubr.bf16.gmra.mrb[0].mxu0 %v348
        %v1194 = vpop.f32.mrb[0].mxu0
        %v1195 = vadd.f32 %v513, %v1194
        %v1196 = vpop.f32.mrb[0].mxu0
        %v1197 = vadd.f32 %v517, %v1196
        %v1198 = vpop.f32.mrb[0].mxu0
        %v1199 = vadd.f32 %v513, %v1198
        %v1200 = vpop.f32.mrb[0].mxu0
        %v1201 = vadd.f32 %v517, %v1200
        %1202 = vmatprep.mubr.bf16.mxu0 %v357
        %1203 = vmatmul.mubr.bf16.gmra.mrb[0].mxu0 %v356
        %v1204 = vpop.f32.mrb[0].mxu0
        %v1205 = vadd.f32 %v513, %v1204
        %v1206 = vpop.f32.mrb[0].mxu0
        %v1207 = vadd.f32 %v517, %v1206
        %v1208 = vpop.f32.mrb[0].mxu0
        %v1209 = vadd.f32 %v513, %v1208
        %v1210 = vpop.f32.mrb[0].mxu0
        %v1211 = vadd.f32 %v517, %v1210
        %1212 = vmatprep.mubr.bf16.mxu0 %v365
        %1213 = vmatmul.mubr.bf16.gmra.mrb[0].mxu0 %v364
        %v1214 = vpop.f32.mrb[0].mxu0
        %v1215 = vadd.f32 %v513, %v1214
        %v1216 = vpop.f32.mrb[0].mxu0
        %v1217 = vadd.f32 %v517, %v1216
        %v1218 = vpop.f32.mrb[0].mxu0
        %v1219 = vadd.f32 %v513, %v1218
        %v1220 = vpop.f32.mrb[0].mxu0
        %v1221 = vadd.f32 %v517, %v1220
        %1222 = vmatprep.mubr.bf16.mxu0 %v373
        %1223 = vmatmul.mubr.bf16.gmra.mrb[0].mxu0 %v372
        %v1224 = vpop.f32.mrb[0].mxu0
        %v1225 = vadd.f32 %v513, %v1224
        %v1226 = vpop.f32.mrb[0].mxu0
        %v1227 = vadd.f32 %v517, %v1226
        %v1228 = vpop.f32.mrb[0].mxu0
        %v1229 = vpop.f32.mrb[0].mxu0
        %1230 = vdwg.mxu0
        %1231 = vmatprep.subr.bf16.mxu0 %v937
        %1232 = vmatpush1.bf16.msra.mxu0 %v936
        %1233 = vmatprep.subr.bf16.mxu0 %v939
        %1234 = vmatpush1.bf16.msra.mxu0 %v938
        %1235 = vmatprep.subr.bf16.mxu0 %v941
        %1236 = vmatpush1.bf16.msra.mxu0 %v940
        %1237 = vmatprep.subr.bf16.mxu0 %v943
        %1238 = vmatpush1.bf16.msra.mxu0 %v942
        %1239 = vmatprep.subr.bf16.mxu0 %v945
        %1240 = vmatpush1.bf16.msra.mxu0 %v944
        %1241 = vmatprep.subr.bf16.mxu0 %v947
        %1242 = vmatpush1.bf16.msra.mxu0 %v946
        %1243 = vmatprep.subr.bf16.mxu0 %v949
        %1244 = vmatpush1.bf16.msra.mxu0 %v948
        %1245 = vmatprep.subr.bf16.mxu0 %v951
        %1246 = vmatpush1.bf16.msra.mxu0 %v950
        %1247 = vmatprep.subr.bf16.mxu0 %v953
        %1248 = vmatpush1.bf16.msra.mxu0 %v952
        %1249 = vmatprep.subr.bf16.mxu0 %v955
        %1250 = vmatpush1.bf16.msra.mxu0 %v954
        %1251 = vmatprep.subr.bf16.mxu0 %v957
        %1252 = vmatpush1.bf16.msra.mxu0 %v956
        %1253 = vmatprep.subr.bf16.mxu0 %v959
        %1254 = vmatpush1.bf16.msra.mxu0 %v958
        %1255 = vmatprep.subr.bf16.mxu0 %v961
        %1256 = vmatpush1.bf16.msra.mxu0 %v960
        %1257 = vmatprep.subr.bf16.mxu0 %v963
        %1258 = vmatpush1.bf16.msra.mxu0 %v962
        %1259 = vmatprep.subr.bf16.mxu0 %v965
        %1260 = vmatpush1.bf16.msra.mxu0 %v964
        %1261 = vmatprep.subr.bf16.mxu0 %v967
        %1262 = vmatpush1.bf16.msra.mxu0 %v966
        %1263 = vmatprep.mubr.bf16.mxu0 %v351
        %1264 = vmatmul.mubr.bf16.gmra.mrb[0].mxu0 %v350
        %v1265 = vpop.f32.mrb[0].mxu0
        %v1266 = vadd.f32 %v1195, %v1265
        %v1267 = vpop.f32.mrb[0].mxu0
        %v1268 = vadd.f32 %v1197, %v1267
        %v1269 = vpop.f32.mrb[0].mxu0
        %v1270 = vadd.f32 %v1199, %v1269
        %v1271 = vpop.f32.mrb[0].mxu0
        %v1272 = vadd.f32 %v1201, %v1271
        %1273 = vmatprep.mubr.bf16.mxu0 %v359
        %1274 = vmatmul.mubr.bf16.gmra.mrb[0].mxu0 %v358
        %v1275 = vpop.f32.mrb[0].mxu0
        %v1276 = vadd.f32 %v1205, %v1275
        %v1277 = vpop.f32.mrb[0].mxu0
        %v1278 = vadd.f32 %v1207, %v1277
        %v1279 = vpop.f32.mrb[0].mxu0
        %v1280 = vadd.f32 %v1209, %v1279
        %v1281 = vpop.f32.mrb[0].mxu0
        %v1282 = vadd.f32 %v1211, %v1281
        %1283 = vmatprep.mubr.bf16.mxu0 %v367
        %1284 = vmatmul.mubr.bf16.gmra.mrb[0].mxu0 %v366
        %v1285 = vpop.f32.mrb[0].mxu0
        %v1286 = vadd.f32 %v1215, %v1285
        %v1287 = vpop.f32.mrb[0].mxu0
        %v1288 = vadd.f32 %v1217, %v1287
        %v1289 = vpop.f32.mrb[0].mxu0
        %v1290 = vadd.f32 %v1219, %v1289
        %v1291 = vpop.f32.mrb[0].mxu0
        %v1292 = vadd.f32 %v1221, %v1291
        %1293 = vmatprep.mubr.bf16.mxu0 %v375
        %1294 = vmatmul.mubr.bf16.gmra.mrb[0].mxu0 %v374
        %v1295 = vpop.f32.mrb[0].mxu0
        %v1296 = vadd.f32 %v1225, %v1295
        %v1297 = vpop.f32.mrb[0].mxu0
        %v1298 = vadd.f32 %v1227, %v1297
        %v1299 = vpop.f32.mrb[0].mxu0
        %v1300 = vpop.f32.mrb[0].mxu0
        %1301 = vdwg.mxu0
        %1302 = vmatprep.subr.bf16.mxu0 %v969
        %1303 = vmatpush1.bf16.msra.mxu0 %v968
        %1304 = vmatprep.subr.bf16.mxu0 %v971
        %1305 = vmatpush1.bf16.msra.mxu0 %v970
        %1306 = vmatprep.subr.bf16.mxu0 %v973
        %1307 = vmatpush1.bf16.msra.mxu0 %v972
        %1308 = vmatprep.subr.bf16.mxu0 %v975
        %1309 = vmatpush1.bf16.msra.mxu0 %v974
        %1310 = vmatprep.subr.bf16.mxu0 %v977
        %1311 = vmatpush1.bf16.msra.mxu0 %v976
        %1312 = vmatprep.subr.bf16.mxu0 %v979
        %1313 = vmatpush1.bf16.msra.mxu0 %v978
        %1314 = vmatprep.subr.bf16.mxu0 %v981
        %1315 = vmatpush1.bf16.msra.mxu0 %v980
        %1316 = vmatprep.subr.bf16.mxu0 %v983
        %1317 = vmatpush1.bf16.msra.mxu0 %v982
        %1318 = vmatprep.subr.bf16.mxu0 %v985
        %1319 = vmatpush1.bf16.msra.mxu0 %v984
        %1320 = vmatprep.subr.bf16.mxu0 %v987
        %1321 = vmatpush1.bf16.msra.mxu0 %v986
        %1322 = vmatprep.subr.bf16.mxu0 %v989
        %1323 = vmatpush1.bf16.msra.mxu0 %v988
        %1324 = vmatprep.subr.bf16.mxu0 %v991
        %1325 = vmatpush1.bf16.msra.mxu0 %v990
        %1326 = vmatprep.subr.bf16.mxu0 %v993
        %1327 = vmatpush1.bf16.msra.mxu0 %v992
        %1328 = vmatprep.subr.bf16.mxu0 %v995
        %1329 = vmatpush1.bf16.msra.mxu0 %v994
        %1330 = vmatprep.subr.bf16.mxu0 %v997
        %1331 = vmatpush1.bf16.msra.mxu0 %v996
        %1332 = vmatprep.subr.bf16.mxu0 %v999
        %1333 = vmatpush1.bf16.msra.mxu0 %v998
        %1334 = vmatprep.mubr.bf16.mxu0 %v353
        %1335 = vmatmul.mubr.bf16.gmra.mrb[0].mxu0 %v352
        %v1336 = vpop.f32.mrb[0].mxu0
        %v1337 = vadd.f32 %v1266, %v1336
        %v1338 = vpop.f32.mrb[0].mxu0
        %v1339 = vadd.f32 %v1268, %v1338
        %v1340 = vpop.f32.mrb[0].mxu0
        %v1341 = vadd.f32 %v1270, %v1340
        %v1342 = vpop.f32.mrb[0].mxu0
        %v1343 = vadd.f32 %v1272, %v1342
        %1344 = vmatprep.mubr.bf16.mxu0 %v361
        %1345 = vmatmul.mubr.bf16.gmra.mrb[0].mxu0 %v360
        %v1346 = vpop.f32.mrb[0].mxu0
        %v1347 = vadd.f32 %v1276, %v1346
        %v1348 = vpop.f32.mrb[0].mxu0
        %v1349 = vadd.f32 %v1278, %v1348
        %v1350 = vpop.f32.mrb[0].mxu0
        %v1351 = vadd.f32 %v1280, %v1350
        %v1352 = vpop.f32.mrb[0].mxu0
        %v1353 = vadd.f32 %v1282, %v1352
        %1354 = vmatprep.mubr.bf16.mxu0 %v369
        %1355 = vmatmul.mubr.bf16.gmra.mrb[0].mxu0 %v368
        %v1356 = vpop.f32.mrb[0].mxu0
        %v1357 = vadd.f32 %v1286, %v1356
        %v1358 = vpop.f32.mrb[0].mxu0
        %v1359 = vadd.f32 %v1288, %v1358
        %v1360 = vpop.f32.mrb[0].mxu0
        %v1361 = vadd.f32 %v1290, %v1360
        %v1362 = vpop.f32.mrb[0].mxu0
        %v1363 = vadd.f32 %v1292, %v1362
        %1364 = vmatprep.mubr.bf16.mxu0 %v377
        %1365 = vmatmul.mubr.bf16.gmra.mrb[0].mxu0 %v376
        %v1366 = vpop.f32.mrb[0].mxu0
        %v1367 = vadd.f32 %v1296, %v1366
        %v1368 = vpop.f32.mrb[0].mxu0
        %v1369 = vadd.f32 %v1298, %v1368
        %v1370 = vpop.f32.mrb[0].mxu0
        %v1371 = vpop.f32.mrb[0].mxu0
        %1372 = vdwg.mxu0
        %1373 = vmatprep.subr.bf16.mxu0 %v1001
        %1374 = vmatpush1.bf16.msra.mxu0 %v1000
        %1375 = vmatprep.subr.bf16.mxu0 %v1003
        %1376 = vmatpush1.bf16.msra.mxu0 %v1002
        %1377 = vmatprep.subr.bf16.mxu0 %v1005
        %1378 = vmatpush1.bf16.msra.mxu0 %v1004
        %1379 = vmatprep.subr.bf16.mxu0 %v1007
        %1380 = vmatpush1.bf16.msra.mxu0 %v1006
        %1381 = vmatprep.subr.bf16.mxu0 %v1009
        %1382 = vmatpush1.bf16.msra.mxu0 %v1008
        %1383 = vmatprep.subr.bf16.mxu0 %v1011
        %1384 = vmatpush1.bf16.msra.mxu0 %v1010
        %1385 = vmatprep.subr.bf16.mxu0 %v1013
        %1386 = vmatpush1.bf16.msra.mxu0 %v1012
        %1387 = vmatprep.subr.bf16.mxu0 %v1015
        %1388 = vmatpush1.bf16.msra.mxu0 %v1014
        %1389 = vmatprep.subr.bf16.mxu0 %v1017
        %1390 = vmatpush1.bf16.msra.mxu0 %v1016
        %1391 = vmatprep.subr.bf16.mxu0 %v1019
        %1392 = vmatpush1.bf16.msra.mxu0 %v1018
        %1393 = vmatprep.subr.bf16.mxu0 %v1021
        %1394 = vmatpush1.bf16.msra.mxu0 %v1020
        %1395 = vmatprep.subr.bf16.mxu0 %v1023
        %1396 = vmatpush1.bf16.msra.mxu0 %v1022
        %1397 = vmatprep.subr.bf16.mxu0 %v1025
        %1398 = vmatpush1.bf16.msra.mxu0 %v1024
        %1399 = vmatprep.subr.bf16.mxu0 %v1027
        %1400 = vmatpush1.bf16.msra.mxu0 %v1026
        %1401 = vmatprep.subr.bf16.mxu0 %v1029
        %1402 = vmatpush1.bf16.msra.mxu0 %v1028
        %1403 = vmatprep.subr.bf16.mxu0 %v1031
        %1404 = vmatpush1.bf16.msra.mxu0 %v1030
        %1405 = vmatprep.mubr.bf16.mxu0 %v355
        %1406 = vmatmul.mubr.bf16.gmra.mrb[0].mxu0 %v354
        %v1407 = vpop.f32.mrb[0].mxu0
        %v1408 = vadd.f32 %v1337, %v1407
        %v1409 = vpop.f32.mrb[0].mxu0
        %v1410 = vadd.f32 %v1339, %v1409
        %v1411 = vpop.f32.mrb[0].mxu0
        %v1412 = vadd.f32 %v1341, %v1411
        %v1413 = vpop.f32.mrb[0].mxu0
        %v1414 = vadd.f32 %v1343, %v1413
        %1415 = vmatprep.mubr.bf16.mxu0 %v363
        %1416 = vmatmul.mubr.bf16.gmra.mrb[0].mxu0 %v362
        %v1417 = vpop.f32.mrb[0].mxu0
        %v1418 = vadd.f32 %v1347, %v1417
        %v1419 = vpop.f32.mrb[0].mxu0
        %v1420 = vadd.f32 %v1349, %v1419
        %v1421 = vpop.f32.mrb[0].mxu0
        %v1422 = vadd.f32 %v1351, %v1421
        %v1423 = vpop.f32.mrb[0].mxu0
        %v1424 = vadd.f32 %v1353, %v1423
        %1425 = vmatprep.mubr.bf16.mxu0 %v371
        %1426 = vmatmul.mubr.bf16.gmra.mrb[0].mxu0 %v370
        %v1427 = vpop.f32.mrb[0].mxu0
        %v1428 = vadd.f32 %v1357, %v1427
        %v1429 = vpop.f32.mrb[0].mxu0
        %v1430 = vadd.f32 %v1359, %v1429
        %v1431 = vpop.f32.mrb[0].mxu0
        %v1432 = vadd.f32 %v1361, %v1431
        %v1433 = vpop.f32.mrb[0].mxu0
        %v1434 = vadd.f32 %v1363, %v1433
        %1435 = vmatprep.mubr.bf16.mxu0 %v379
        %1436 = vmatmul.mubr.bf16.gmra.mrb[0].mxu0 %v378
        %v1437 = vpop.f32.mrb[0].mxu0
        %v1438 = vadd.f32 %v1367, %v1437
        %v1439 = vpop.f32.mrb[0].mxu0
        %v1440 = vadd.f32 %v1369, %v1439
        %v1441 = vpop.f32.mrb[0].mxu0
        %v1442 = vpop.f32.mrb[0].mxu0
        %1443 = vdwg.mxu0
        %v1444 = vtanh.pop %v1408
        %v1445 = vtanh.pop %v1410
        %v1446 = vtanh.pop %v1412
        %v1447 = vtanh.pop %v1414
        %v1448 = vtanh.pop %v1418
        %v1449 = vtanh.pop %v1420
        %v1450 = vtanh.pop %v1422
        %v1451 = vtanh.pop %v1424
        %v1452 = vtanh.pop %v1428
        %v1453 = vtanh.pop %v1430
        %v1454 = vtanh.pop %v1432
        %v1455 = vtanh.pop %v1434
        %v1456 = vtanh.pop %v1438
        %v1457 = vtanh.pop %v1440
        %v1458 = vpack.c.bf16 %v1446, %v1444
        %v1459 = vpack.c.bf16 %v1447, %v1445
        %v1460 = vpack.c.bf16 %v1450, %v1448
        %v1461 = vpack.c.bf16 %v1451, %v1449
        %v1462 = vpack.c.bf16 %v1454, %v1452
        %v1463 = vpack.c.bf16 %v1455, %v1453
        %v1464 = vpack.c.bf16 %v1456, %v1456
        %v1465 = vpack.c.bf16 %v1457, %v1457
        %v1466 = vld [vmem:[#allocation7] sm:$0xf]
        %v1467 = vld [vmem:[#allocation7 + $0x4] sm:$0xf]
        %v1468 = vld [vmem:[#allocation7 + $0x8] sm:$0xf]
        %v1469 = vld [vmem:[#allocation7 + $0xc] sm:$0xf]
        %v1470 = vld [vmem:[#allocation7 + $0x10] sm:$0xf]
        %v1471 = vld [vmem:[#allocation7 + $0x14] sm:$0xf]
        %v1472 = vld [vmem:[#allocation7 + $0x18] sm:$0xf]
        %v1473 = vld [vmem:[#allocation7 + $0x1c] sm:$0xf]
        %v1474 = vld [vmem:[#allocation7 + $0x20] sm:$0xf]
        %v1475 = vld [vmem:[#allocation7 + $0x24] sm:$0xf]
        %v1476 = vld [vmem:[#allocation7 + $0x28] sm:$0xf]
        %v1477 = vld [vmem:[#allocation7 + $0x2c] sm:$0xf]
        %v1478 = vld [vmem:[#allocation7 + $0x30] sm:$0xf]
        %v1479 = vld [vmem:[#allocation7 + $0x34] sm:$0xf]
        %v1480 = vld [vmem:[#allocation7 + $0x38] sm:$0xf]
        %v1481 = vld [vmem:[#allocation7 + $0x3c] sm:$0xf]
        %v1482 = vld [vmem:[#allocation7 + $0x40] sm:$0xf]
        %v1483 = vld [vmem:[#allocation7 + $0x44] sm:$0xf]
        %v1484 = vld [vmem:[#allocation7 + $0x48] sm:$0xf]
        %v1485 = vld [vmem:[#allocation7 + $0x4c] sm:$0xf]
        %v1486 = vld [vmem:[#allocation7 + $0x50] sm:$0xf]
        %v1487 = vld [vmem:[#allocation7 + $0x54] sm:$0xf]
        %v1488 = vld [vmem:[#allocation7 + $0x58] sm:$0xf]
        %v1489 = vld [vmem:[#allocation7 + $0x5c] sm:$0xf]
        %v1490 = vld [vmem:[#allocation7 + $0x60] sm:$0xf]
        %v1491 = vld [vmem:[#allocation7 + $0x64] sm:$0xf]
        %v1492 = vld [vmem:[#allocation7 + $0x68] sm:$0xf]
        %v1493 = vld [vmem:[#allocation7 + $0x6c] sm:$0xf]
        %v1494 = vld [vmem:[#allocation7 + $0x70] sm:$0xf]
        %v1495 = vld [vmem:[#allocation7 + $0x74] sm:$0xf]
        %v1496 = vld [vmem:[#allocation7 + $0x78] sm:$0xf]
        %v1497 = vld [vmem:[#allocation7 + $0x7c] sm:$0xf]
        %v1498 = vld [vmem:[%s4] sm:$0x1]
        %v1500 = vlaneseq
        %v1501 = vshrl.u32 %v1500, 7
        %v1502 = vsub.s32 0, %v1501
        %v1503 = vrot.slane %v1498, %v1502
        %v1537 = vunpack.c.l.b16 %v1466
        %v1538 = vunpack.c.l.b16 %v1467
        %v1539 = vunpack.c.l.b16 %v1468
        %v1540 = vunpack.c.l.b16 %v1469
        %v1541 = vunpack.c.l.b16 %v1470
        %v1542 = vunpack.c.l.b16 %v1471
        %v1543 = vunpack.c.l.b16 %v1472
        %v1544 = vunpack.c.l.b16 %v1473
        %v1545 = vunpack.c.l.b16 %v1474
        %v1546 = vunpack.c.l.b16 %v1475
        %v1547 = vunpack.c.l.b16 %v1476
        %v1548 = vunpack.c.l.b16 %v1477
        %v1549 = vunpack.c.l.b16 %v1478
        %v1550 = vunpack.c.l.b16 %v1479
        %v1551 = vunpack.c.l.b16 %v1480
        %v1552 = vunpack.c.l.b16 %v1481
        %v1553 = vunpack.c.l.b16 %v1482
        %v1554 = vunpack.c.l.b16 %v1483
        %v1555 = vunpack.c.l.b16 %v1484
        %v1556 = vunpack.c.l.b16 %v1485
        %v1557 = vunpack.c.l.b16 %v1486
        %v1558 = vunpack.c.l.b16 %v1487
        %v1559 = vunpack.c.l.b16 %v1488
        %v1560 = vunpack.c.l.b16 %v1489
        %v1561 = vunpack.c.l.b16 %v1490
        %v1562 = vunpack.c.l.b16 %v1491
        %v1563 = vunpack.c.l.b16 %v1492
        %v1564 = vunpack.c.l.b16 %v1493
        %v1565 = vunpack.c.l.b16 %v1494
        %v1566 = vunpack.c.l.b16 %v1495
        %v1567 = vunpack.c.l.b16 %v1496
        %v1568 = vunpack.c.l.b16 %v1497
        %v1569 = vpack.c.b16 %v1538, %v1537
        %v1570 = vpack.c.b16 %v1540, %v1539
        %v1571 = vpack.c.b16 %v1542, %v1541
        %v1572 = vpack.c.b16 %v1544, %v1543
        %v1573 = vpack.c.b16 %v1546, %v1545
        %v1574 = vpack.c.b16 %v1548, %v1547
        %v1575 = vpack.c.b16 %v1550, %v1549
        %v1576 = vpack.c.b16 %v1552, %v1551
        %v1577 = vpack.c.b16 %v1554, %v1553
        %v1578 = vpack.c.b16 %v1556, %v1555
        %v1579 = vpack.c.b16 %v1558, %v1557
        %v1580 = vpack.c.b16 %v1560, %v1559
        %v1581 = vpack.c.b16 %v1562, %v1561
        %v1582 = vpack.c.b16 %v1564, %v1563
        %v1583 = vpack.c.b16 %v1566, %v1565
        %v1584 = vpack.c.b16 %v1568, %v1567
        %1601 = vmatprep.subr.bf16.mxu0 0
        %1602 = vmatpush1.bf16.msra.mxu0 %v1569
        %1603 = vmatprep.subr.bf16.mxu0 0
        %1604 = vmatpush1.bf16.msra.mxu0 %v1570
        %1605 = vmatprep.subr.bf16.mxu0 0
        %1606 = vmatpush1.bf16.msra.mxu0 %v1571
        %1607 = vmatprep.subr.bf16.mxu0 0
        %1608 = vmatpush1.bf16.msra.mxu0 %v1572
        %1609 = vmatprep.subr.bf16.mxu0 0
        %1610 = vmatpush1.bf16.msra.mxu0 %v1573
        %1611 = vmatprep.subr.bf16.mxu0 0
        %1612 = vmatpush1.bf16.msra.mxu0 %v1574
        %1613 = vmatprep.subr.bf16.mxu0 0
        %1614 = vmatpush1.bf16.msra.mxu0 %v1575
        %1615 = vmatprep.subr.bf16.mxu0 0
        %1616 = vmatpush1.bf16.msra.mxu0 %v1576
        %1617 = vmatprep.subr.bf16.mxu0 0
        %1618 = vmatpush1.bf16.msra.mxu0 %v1577
        %1619 = vmatprep.subr.bf16.mxu0 0
        %1620 = vmatpush1.bf16.msra.mxu0 %v1578
        %1621 = vmatprep.subr.bf16.mxu0 0
        %1622 = vmatpush1.bf16.msra.mxu0 %v1579
        %1623 = vmatprep.subr.bf16.mxu0 0
        %1624 = vmatpush1.bf16.msra.mxu0 %v1580
        %1625 = vmatprep.subr.bf16.mxu0 0
        %1626 = vmatpush1.bf16.msra.mxu0 %v1581
        %1627 = vmatprep.subr.bf16.mxu0 0
        %1628 = vmatpush1.bf16.msra.mxu0 %v1582
        %1629 = vmatprep.subr.bf16.mxu0 0
        %1630 = vmatpush1.bf16.msra.mxu0 %v1583
        %1631 = vmatprep.subr.bf16.mxu0 0
        %1632 = vmatpush1.bf16.msra.mxu0 %v1584
        %1633 = vmatprep.mubr.bf16.mxu0 %v1459
        %1634 = vmatmul.mubr.bf16.gmra.mrb[0].mxu0 %v1458
        %v1635 = vpop.f32.mrb[0].mxu0
        %v1636 = vadd.f32 %v1503, %v1635
        %v1637 = vpop.f32.mrb[0].mxu0
        %v1638 = vpop.f32.mrb[0].mxu0
        %v1639 = vadd.f32 %v1503, %v1638
        %v1640 = vpop.f32.mrb[0].mxu0
        %1641 = vmatprep.mubr.bf16.mxu0 %v1461
        %1642 = vmatmul.mubr.bf16.gmra.mrb[0].mxu0 %v1460
        %v1643 = vpop.f32.mrb[0].mxu0
        %v1644 = vadd.f32 %v1503, %v1643
        %v1645 = vpop.f32.mrb[0].mxu0
        %v1646 = vpop.f32.mrb[0].mxu0
        %v1647 = vadd.f32 %v1503, %v1646
        %v1648 = vpop.f32.mrb[0].mxu0
        %1649 = vmatprep.mubr.bf16.mxu0 %v1463
        %1650 = vmatmul.mubr.bf16.gmra.mrb[0].mxu0 %v1462
        %v1651 = vpop.f32.mrb[0].mxu0
        %v1652 = vadd.f32 %v1503, %v1651
        %v1653 = vpop.f32.mrb[0].mxu0
        %v1654 = vpop.f32.mrb[0].mxu0
        %v1655 = vadd.f32 %v1503, %v1654
        %v1656 = vpop.f32.mrb[0].mxu0
        %1657 = vmatprep.mubr.bf16.mxu0 %v1465
        %1658 = vmatmul.mubr.bf16.gmra.mrb[0].mxu0 %v1464
        %v1659 = vpop.f32.mrb[0].mxu0
        %v1660 = vadd.f32 %v1503, %v1659
        %v1661 = vpop.f32.mrb[0].mxu0
        %v1662 = vpop.f32.mrb[0].mxu0
        %v1663 = vpop.f32.mrb[0].mxu0
        %1664 = vdwg.mxu0
        %1665 = vst [vmem:[%s279] sm:$0xff] %v1636
        %1666 = vst [vmem:[%s279 + $0x8] sm:$0xff] %v1639
        %1667 = vst [vmem:[%s279 + $0x10] sm:$0xff] %v1644
        %1668 = vst [vmem:[%s279 + $0x18] sm:$0xff] %v1647
        %1669 = vst [vmem:[%s279 + $0x20] sm:$0xff] %v1652
        %1670 = vst [vmem:[%s279 + $0x28] sm:$0xff] %v1655
        %1671 = vst [vmem:[%s279 + $0x30] sm:$0xff] %v1660
        %s1672 = sand.u32 %s141, 1
        %s1673 = scalar_lea.sflag [#allocation4], %s1672
        %s1674 = sand.u32 %s141, 1
        %s1675 = smul.addr %s1674, 56
        %s1676 = scalar_lea.vmem [#allocation8], %s1675
        // Predicated region
        $region53: #{tpu_custom_call.1} parent=39 // pred_check
          %p1677 = pneg %p151
        $region54: #{tpu_custom_call.1} parent=39 // pred_check_branch
          %1679 = sbr.rel (%p1677) target = $region56
        $region55: #{tpu_custom_call.1} parent=39 // pred_region
          %s1680 = smul.u32 7, %s23
          %s1681 = ssub.s32 13, %s1680
          %p1682 = scmp.lt.s32.totalorder %s1681, 7
          %s1683 = scalar_select %p1682, %s1681, 7
          %s1684 = smul.u32 128, %s1683
          %s1686 = ssub.s32 896, %s1684
          %1687 = vsyncadd %s1673, %s1686
          %p1688 = scmp.ne.s32.totalorder 0, %s1684
          %s1689 = smul.addr %s1680, 128
          %s1690 = scalar_lea.hbm %s5, %s1689
          %s1691 = smul.u32 8, %s1683
          %s1692 = sshll.u32 %s1676, 4
          %s1693 = int_to_ptr.vmem [resolvable:$true] %s1692
          %s1694 = sshll.u32 %s1691, 4
          %1698 = dma.vmem_to_hbm [thread:$0]  (%p1688), %s1693, %s1694, %s1690, %s1673, 128, 128, 8
        $region56: #{tpu_custom_call.1} parent=39 // pred_fallthru
          _
      $region40: #{tpu_custom_call.1} parent=5 // pred_fallthru
        _
      %p1699 = scmp.le.s32.totalorder 2, %s18
      // Predicated region
      $region57: #{tpu_custom_call.1} parent=5 // pred_check
        %p1700 = pneg %p1699
      $region58: #{tpu_custom_call.1} parent=5 // pred_check_branch
        %1702 = sbr.rel (%p1700) target = $region60
      $region59: #{tpu_custom_call.1} parent=5 // pred_region
        %s1703 = ssub.s32 %s18, 2
        // Predicated region
        $region61: #{tpu_custom_call.1} parent=59 // pred_check
          %p1704 = pneg %p157
        $region62: #{tpu_custom_call.1} parent=59 // pred_check_branch
          %1706 = sbr.rel (%p1704) target = $region64
        $region63: #{tpu_custom_call.1} parent=59 // pred_region
          %s1707 = sand.u32 %s142, 1
          %s1708 = scalar_lea.sflag [#allocation4], %s1707
          %s1709 = sand.u32 %s142, 1
          %s1710 = smul.addr %s1709, 56
          %s1711 = scalar_lea.vmem [#allocation8], %s1710
          %1712 = dma.done %s1708, 896
        $region64: #{tpu_custom_call.1} parent=59 // pred_fallthru
          _
      $region60: #{tpu_custom_call.1} parent=5 // pred_fallthru
        _
    $region6: #{tpu_custom_call.1} parent=1 // loop_footer
      %s22 = sadd.s32 1, %s18
    $region7: #{tpu_custom_call.1} parent=1 // loop_footer_branch
      %17 = sbr.rel target = $region3
    $region8: #{tpu_custom_call.1} parent=1 // loop_exit
      _
    %1713 = vsyncpa [#allocation3], 1
    %s1714 = scalar_lea.sflag [#allocation3], 1
    %1715 = vsyncpa %s1714, 1
    %1716 = vsyncpa [#allocation6], 1
    %1717 = vsyncpa [#allocation4], 1
    %s1718 = scalar_lea.sflag [#allocation4], 1
    %1719 = vsyncpa %s1718, 1

</llo_original>
